<compile_context>
chip_gen: v7x
topology: tpu7x:2x2x1
jax: 0.10.0
libtpu: 0.0.40
codegen_flags: <defaults>
</compile_context>

<pallas_src>
import functools
import math

import numpy as np
import jax
import jax.numpy as jnp
from jax import lax
from jax.experimental import pallas as pl
from jax.experimental.pallas import tpu as pltpu


def _round_up(x, m):
    return ((x + m - 1) // m) * m


# ----------------------------------------------------------------------------
# Per-face setup, hoisted out of the kernel (vectorized over B*Nf)
# ----------------------------------------------------------------------------
def _precompute_face_tables(face_vertices, face_textures, unroll):
    """face_vertices/face_textures: [B, Nf, 3, 3] -> (bbox_flat, params_flat, nf_pad).

    bbox  per face: [xmin, xmax, ymin, ymax]   (empty box if face is invalid)
    param per face: [a0,b0,c0,a1,b1,c1,iz0,iz1,iz2, r0,g0,b0, r1,g1,b1, r2,g2,b2]
    """
    B, nf = face_vertices.shape[0], face_vertices.shape[1]
    nf_pad = max(unroll, _round_up(nf, unroll))

    fv = face_vertices.astype(jnp.float32)
    ft = face_textures.astype(jnp.float32)

    x0, y0, z0 = fv[:, :, 0, 0], fv[:, :, 0, 1], fv[:, :, 0, 2]
    x1, y1, z1 = fv[:, :, 1, 0], fv[:, :, 1, 1], fv[:, :, 1, 2]
    x2, y2, z2 = fv[:, :, 2, 0], fv[:, :, 2, 1], fv[:, :, 2, 2]

    det = (y1 - y2) * (x0 - x2) + (x2 - x1) * (y0 - y2)
    valid = (jnp.abs(det) > 1e-10) & (z0 > 0.0) & (z1 > 0.0) & (z2 > 0.0)
    safe_det = jnp.where(jnp.abs(det) > 1e-10, det, 1.0)
    inv_det = 1.0 / safe_det

    # Edge coefficients with 1/det folded in (signed det -> fill_back).
    a0 = (y1 - y2) * inv_det
    b0 = (x2 - x1) * inv_det
    c0 = -(a0 * x2 + b0 * y2)
    a1 = (y2 - y0) * inv_det
    b1 = (x0 - x2) * inv_det
    c1 = -(a1 * x2 + b1 * y2)

    eps = 1e-8
    iz0 = 1.0 / jnp.maximum(z0, eps)
    iz1 = 1.0 / jnp.maximum(z1, eps)
    iz2 = 1.0 / jnp.maximum(z2, eps)

    big = jnp.float32(1e30)
    xmin = jnp.where(valid, jnp.minimum(jnp.minimum(x0, x1), x2), big)
    xmax = jnp.where(valid, jnp.maximum(jnp.maximum(x0, x1), x2), -big)
    ymin = jnp.where(valid, jnp.minimum(jnp.minimum(y0, y1), y2), big)
    ymax = jnp.where(valid, jnp.maximum(jnp.maximum(y0, y1), y2), -big)

    bbox = jnp.stack([xmin, xmax, ymin, ymax], axis=-1)          # [B, nf, 4]
    colors = ft.reshape(B, nf, 9)                                 # [B, nf, 9]
    params = jnp.concatenate(
        [jnp.stack([a0, b0, c0, a1, b1, c1, iz0, iz1, iz2], axis=-1), colors],
        axis=-1)                                                  # [B, nf, 18]

    if nf_pad != nf:
        pad = nf_pad - nf
        empty = jnp.tile(jnp.array([big, -big, big, -big], jnp.float32),
                         (B, pad, 1))
        bbox = jnp.concatenate([bbox, empty], axis=1)
        params = jnp.concatenate(
            [params, jnp.zeros((B, pad, 18), jnp.float32)], axis=1)

    return (bbox.reshape(B * nf_pad * 4),
            params.reshape(B * nf_pad * 18),
            nf_pad)


# ----------------------------------------------------------------------------
# Pallas rasterization kernel (one pixel tile per grid step)
# ----------------------------------------------------------------------------
def _rasterize_kernel(bbox_ref, par_ref, rgb_ref, mask_ref, depth_ref, *,
                      nf_pad, unroll, tile_h, tile_w, H, W, y_off, x_off,
                      near, far, bg):
    # bbox_ref : SMEM 1-D f32 [B*nf_pad*4]   (xmin, xmax, ymin, ymax)
    # par_ref  : SMEM 1-D f32 [B*nf_pad*18]  (edge coeffs, 1/z, vertex colors)
    # rgb_ref  : VMEM block (1, 3, tile_h, tile_w)
    # mask_ref / depth_ref : VMEM block (1, tile_h, tile_w)
    b = pl.program_id(0)
    ty = pl.program_id(1)
    tx = pl.program_id(2)

    inv_h = 1.0 / float(H)
    inv_w = 1.0 / float(W)

    row0 = ty * tile_h
    col0 = tx * tile_w
    row = lax.broadcasted_iota(jnp.int32, (tile_h, tile_w), 0) + row0
    col = lax.broadcasted_iota(jnp.int32, (tile_h, tile_w), 1) + col0
    yp = (2.0 * row.astype(jnp.float32) + y_off) * inv_h
    xp = (2.0 * col.astype(jnp.float32) + x_off) * inv_w

    # Tile bounds in NDC (pixel-center extents) for scalar bbox culling.
    row0f = row0.astype(jnp.float32)
    col0f = col0.astype(jnp.float32)
    tile_ymin = (2.0 * row0f + y_off) * inv_h
    tile_ymax = (2.0 * (row0f + float(tile_h - 1)) + y_off) * inv_h
    tile_xmin = (2.0 * col0f + x_off) * inv_w
    tile_xmax = (2.0 * (col0f + float(tile_w - 1)) + x_off) * inv_w

    eps = 1e-8
    face_base = b * nf_pad

    def face_update(f, carry):
        depth_v, mask_v, r_v, g_v, b_v = carry
        bb = (face_base + f) * 4
        xmin = bbox_ref[bb + 0]
        xmax = bbox_ref[bb + 1]
        ymin = bbox_ref[bb + 2]
        ymax = bbox_ref[bb + 3]
        # Invalid / degenerate / behind-camera faces were given an empty bbox
        # in the wrapper, so this single test rejects them too.
        hit = ((xmax >= tile_xmin) & (xmin <= tile_xmax)
               & (ymax >= tile_ymin) & (ymin <= tile_ymax))

        def shade(c):
            depth_v, mask_v, r_v, g_v, b_v = c
            p = (face_base + f) * 18
            a0 = par_ref[p + 0]; b0c = par_ref[p + 1]; c0 = par_ref[p + 2]
            a1 = par_ref[p + 3]; b1c = par_ref[p + 4]; c1 = par_ref[p + 5]
            iz0 = par_ref[p + 6]; iz1 = par_ref[p + 7]; iz2 = par_ref[p + 8]
            cr0 = par_ref[p + 9]; cg0 = par_ref[p + 10]; cb0 = par_ref[p + 11]
            cr1 = par_ref[p + 12]; cg1 = par_ref[p + 13]; cb1 = par_ref[p + 14]
            cr2 = par_ref[p + 15]; cg2 = par_ref[p + 16]; cb2 = par_ref[p + 17]

            # Screen-space barycentrics (vector), perspective-correct interp.
            w0 = a0 * xp + b0c * yp + c0
            w1 = a1 * xp + b1c * yp + c1
            w2 = 1.0 - w0 - w1
            inside = (w0 >= 0.0) & (w1 >= 0.0) & (w2 >= 0.0)

            w0z = w0 * iz0
            w1z = w1 * iz1
            w2z = w2 * iz2
            zinv = jnp.maximum(w0z + w1z + w2z, eps)
            zp = pl.reciprocal(zinv, approx=True)
            zp = zp * (2.0 - zinv * zp)  # one Newton-Raphson refinement

            upd = (inside & (zp > float(near)) & (zp < float(far))
                   & (zp < depth_v))

            ww0 = w0z * zp
            ww1 = w1z * zp
            ww2 = w2z * zp

            new_depth = jnp.where(upd, zp, depth_v)
            new_mask = jnp.where(upd, 1.0, mask_v)
            new_r = jnp.where(upd, ww0 * cr0 + ww1 * cr1 + ww2 * cr2, r_v)
            new_g = jnp.where(upd, ww0 * cg0 + ww1 * cg1 + ww2 * cg2, g_v)
            new_b = jnp.where(upd, ww0 * cb0 + ww1 * cb1 + ww2 * cb2, b_v)
            return (new_depth, new_mask, new_r, new_g, new_b)

        return lax.cond(hit, shade, lambda c: c, carry)

    def body(i, carry):
        f = i * unroll
        for u in range(unroll):              # manual 2x unroll (independent faces)
            carry = face_update(f + u, carry)
        return carry

    init = (jnp.full((tile_h, tile_w), float(far), jnp.float32),
            jnp.zeros((tile_h, tile_w), jnp.float32),
            jnp.full((tile_h, tile_w), float(bg[0]), jnp.float32),
            jnp.full((tile_h, tile_w), float(bg[1]), jnp.float32),
            jnp.full((tile_h, tile_w), float(bg[2]), jnp.float32))

    depth_v, mask_v, r_v, g_v, b_v = lax.fori_loop(
        0, nf_pad // unroll, body, init)

    # Single full-tile, lane-dense (unmasked) stores.
    rgb_ref[0, 0] = r_v
    rgb_ref[0, 1] = g_v
    rgb_ref[0, 2] = b_v
    mask_ref[0] = mask_v
    depth_ref[0] = depth_v


def rasterize_pallas(face_vertices, face_textures, image_height, image_width,
                     near, far, background_color, render_outside,
                     tile_h=32, tile_w=128, unroll=2):
    """face_vertices/face_textures: [B, Nf, 3, 3] -> (rgb, mask, depth).

    If render_outside=False only the center HxW region is rasterized
    (equivalent to rendering the 3x canvas and cropping, but 9x cheaper).
    """
    B = face_vertices.shape[0]
    H, W = int(image_height), int(image_width)

    if render_outside:
        ch, cw = 3 * H, 3 * W
        y_off, x_off = float(1 - 3 * H), float(1 - 3 * W)
    else:
        ch, cw = H, W
        y_off, x_off = float(1 - H), float(1 - W)

    tile_h = min(tile_h, _round_up(ch, 8))      # multiple of 8
    tile_w = min(tile_w, _round_up(cw, 128))    # multiple of 128 (lane-dense)
    chp = _round_up(ch, tile_h)
    cwp = _round_up(cw, tile_w)
    grid = (B, chp // tile_h, cwp // tile_w)

    bbox_flat, params_flat, nf_pad = _precompute_face_tables(
        face_vertices, face_textures, unroll)

    kernel = functools.partial(
        _rasterize_kernel, nf_pad=nf_pad, unroll=unroll,
        tile_h=tile_h, tile_w=tile_w,
        H=H, W=W, y_off=y_off, x_off=x_off,
        near=float(near), far=float(far),
        bg=tuple(float(c) for c in background_color))

    rgb_cf, mask, depth = pl.pallas_call(
        kernel,
        out_shape=(jax.ShapeDtypeStruct((B, 3, chp, cwp), jnp.float32),
                   jax.ShapeDtypeStruct((B, chp, cwp), jnp.float32),
                   jax.ShapeDtypeStruct((B, chp, cwp), jnp.float32)),
        grid=grid,
        in_specs=[pl.BlockSpec(memory_space=pltpu.MemorySpace.SMEM),
                  pl.BlockSpec(memory_space=pltpu.MemorySpace.SMEM)],
        out_specs=(pl.BlockSpec((1, 3, tile_h, tile_w), lambda b, i, j: (b, 0, i, j)),
                   pl.BlockSpec((1, tile_h, tile_w), lambda b, i, j: (b, i, j)),
                   pl.BlockSpec((1, tile_h, tile_w), lambda b, i, j: (b, i, j))),
        compiler_params=pltpu.CompilerParams(
            dimension_semantics=("parallel", "parallel", "parallel")),
    )(bbox_flat, params_flat)

    # Crop padding first (cheap), then transpose rgb to channel-last to match
    # the reference's [B, H, W, 3] output.  Kernel output stays channel-first
    # so the in-kernel stores remain 128-lane dense.
    rgb = jnp.transpose(rgb_cf[:, :, :ch, :cw], (0, 2, 3, 1))
    mask = mask[:, :ch, :cw]
    depth = depth[:, :ch, :cw]
    return rgb, mask, depth


# ----------------------------------------------------------------------------
# Plain-JAX glue (projection + vertices_to_faces), mirroring neural_renderer
# ----------------------------------------------------------------------------
def projection(vertices, K, R, t, image_height, image_width, eps=1e-9):
    # vertices: [B, Nv, 3]; K,R: [B,3,3]; t: [B,1,3]
    v = jnp.matmul(vertices, jnp.swapaxes(R, 1, 2)) + t
    x, y, z = v[..., 0], v[..., 1], v[..., 2]
    x_ = x / (z + eps)
    y_ = y / (z + eps)
    v2 = jnp.stack([x_ * z, y_ * z, z], axis=-1)
    v2 = jnp.matmul(v2, jnp.swapaxes(K, 1, 2))
    u = v2[..., 0] / (v2[..., 2] + eps)
    vv = v2[..., 1] / (v2[..., 2] + eps)
    vv = image_height - vv
    u = 2.0 * (u - image_width / 2.0) / image_width
    vv = 2.0 * (vv - image_height / 2.0) / image_height
    return jnp.stack([u, vv, z], axis=-1)


def vertices_to_faces(vertices, faces):
    # vertices: [B, Nv, C], faces: [B, Nf, 3] int -> [B, Nf, 3, C]
    return jax.vmap(lambda v, f: v[f])(vertices, faces)


def render_pipeline(vertices, faces, textures, K, R, t, *,
                    image_height, image_width, near, far,
                    background_color, render_outside):
    vertices = vertices.astype(jnp.float32)
    textures = textures.astype(jnp.float32)
    faces = faces.astype(jnp.int32)
    K = K.astype(jnp.float32)
    R = R.astype(jnp.float32)
    t = t.astype(jnp.float32)
    verts_proj = projection(vertices, K, R, t, image_height, image_width)
    face_vertices = vertices_to_faces(verts_proj, faces)
    face_textures = vertices_to_faces(textures, faces)
    return rasterize_pallas(face_vertices, face_textures, image_height,
                            image_width, near, far, background_color,
                            render_outside)


# ----------------------------------------------------------------------------
# Renderer module (Pallas-backed)
# ----------------------------------------------------------------------------
class Renderer:
    def __init__(self, image_height=256, image_width=256,
                 background_color=(0, 0, 0), fill_back=True,
                 camera_mode='projection', K=None, R=None, t=None,
                 perspective=True, viewing_angle=30, near=0.1, far=100.0,
                 render_outside=False):
        self.image_height = int(image_height)
        self.image_width = int(image_width)
        self.background_color = list(background_color)
        self.fill_back = fill_back
        self.render_outside = bool(render_outside)
        self.camera_mode = camera_mode
        if self.camera_mode == 'projection':
            self.K = K
            self.R = R
            self.t = t
        elif self.camera_mode in ['look', 'look_at']:
            # TODO(synk): look/look_at camera transforms not implemented (only
            # the 'projection' path is exercised by this module's forward).
            self.perspective = perspective
            self.viewing_angle = viewing_angle
            self.eye = [0, 0, -(1.0 / math.tan(math.radians(viewing_angle)) + 1)]
            self.camera_direction = [0, 0, 1]
        else:
            raise ValueError('Camera mode has to be one of projection, look or look_at')
        self.near = float(near)
        self.far = float(far)

        # One jitted pipeline (projection + gather + face setup + Pallas rasterize).
        self._pipeline = jax.jit(functools.partial(
            render_pipeline,
            image_height=self.image_height,
            image_width=self.image_width,
            near=self.near, far=self.far,
            background_color=tuple(float(c) for c in self.background_color),
            render_outside=self.render_outside))

    def forward(self, vertices, faces, textures=None, K=None, R=None, t=None):
        return self.render(vertices, faces, textures, K, R, t)

    def render(self, vertices, faces, textures, K=None, R=None, t=None):
        if K is None:
            K = self.K
        if R is None:
            R = self.R
        if t is None:
            t = self.t

        vertices = jnp.asarray(vertices)
        faces = jnp.asarray(faces)
        textures = jnp.asarray(textures)
        K = jnp.asarray(K)
        R = jnp.asarray(R)
        t = jnp.asarray(t)

        rgb, mask, depth = self._pipeline(vertices, faces, textures, K, R, t)

        # Single host sync; the torch module returns .detach().cpu().numpy().
        jax.block_until_ready((rgb, mask, depth))
        rgb_np, mask_np, depth_np = jax.device_get((rgb, mask, depth))
        return np.asarray(rgb_np), np.asarray(mask_np), np.asarray(depth_np)


# ----------------------------------------------------------------------------
# Demo / smoke test
# ----------------------------------------------------------------------------
if __name__ == "__main__":
    key = jax.random.PRNGKey(0)
    B, Nv, Nf = 2, 12, 8
    H = W = 16

    k1, k2, k3 = jax.random.split(key, 3)
    vertices = jax.random.uniform(k1, (B, Nv, 3), jnp.float32,
                                  minval=-0.5, maxval=0.5)
    faces = jax.random.randint(k2, (B, Nf, 3), 0, Nv, dtype=jnp.int32)
    textures = jax.random.uniform(k3, (B, Nv, 3), jnp.float32)  # per-vertex RGB

    # Deterministic camera parameters (the module's K/R/t "parameters").
    focal = float(W)
    K = jnp.broadcast_to(
        jnp.array([[focal, 0.0, W / 2.0],
                   [0.0, focal, H / 2.0],
                   [0.0, 0.0, 1.0]], dtype=jnp.float32), (B, 3, 3))
    R = jnp.broadcast_to(jnp.eye(3, dtype=jnp.float32), (B, 3, 3))
    t = jnp.broadcast_to(jnp.array([[0.0, 0.0, 2.5]], dtype=jnp.float32), (B, 1, 3))

    renderer = Renderer(image_height=H, image_width=W,
                        background_color=[0, 0, 0],
                        camera_mode='projection', K=K, R=R, t=t,
                        near=0.1, far=100.0, render_outside=False)

    rgb, mask, depth = renderer.forward(vertices, faces, textures)

    assert rgb.shape == (B, H, W, 3)
    assert mask.shape == (B, H, W)
    assert depth.shape == (B, H, W)
    assert rgb.dtype == np.float32 and mask.dtype == np.float32 and depth.dtype == np.float32
    assert np.isfinite(rgb).all() and np.isfinite(depth).all() and np.isfinite(mask).all()

    print("KERNEL_OK")
</pallas_src>

<mosaic_0001>
module attributes {stable_mosaic.version = 11 : i64} {
  func.func @_rasterize_kernel(%arg0: i32, %arg1: i32, %arg2: i32, %arg3: memref<64xf32, #tpu.memory_space<smem>>, %arg4: memref<288xf32, #tpu.memory_space<smem>>, %arg5: memref<1x3x16x128xf32, #tpu.memory_space<vmem>>, %arg6: memref<1x16x128xf32, #tpu.memory_space<vmem>>, %arg7: memref<1x16x128xf32, #tpu.memory_space<vmem>>) attributes {dimension_semantics = [#tpu.dimension_semantics<parallel>, #tpu.dimension_semantics<parallel>, #tpu.dimension_semantics<parallel>], iteration_bounds = array<i64: 2, 1, 1>, scalar_prefetch = 0 : i64, scratch_operands = 0 : i64, tpu.core_type = #tpu.core_type<tc>, window_params = [{transform_indices = @transform_0, window_bounds = array<i64: 64>}, {transform_indices = @transform_1, window_bounds = array<i64: 288>}, {transform_indices = @transform_2, window_bounds = array<i64: 1, 3, 16, 128>}, {transform_indices = @transform_3, window_bounds = array<i64: 1, 16, 128>}, {transform_indices = @transform_4, window_bounds = array<i64: 1, 16, 128>}]} {
    %c16_i32 = arith.constant 16 : i32
    %0 = arith.muli %arg1, %c16_i32 : i32
    %c128_i32 = arith.constant 128 : i32
    %1 = arith.muli %arg2, %c128_i32 : i32
    %2 = tpu.iota {dimensions = array<i32: 0>} : vector<16x128xi32>
    %3 = vector.broadcast %0 : i32 to vector<16x128xi32>
    %4 = arith.addi %2, %3 : vector<16x128xi32>
    %5 = tpu.iota {dimensions = array<i32: 1>} : vector<16x128xi32>
    %6 = vector.broadcast %1 : i32 to vector<16x128xi32>
    %7 = arith.addi %5, %6 : vector<16x128xi32>
    %8 = arith.sitofp %4 : vector<16x128xi32> to vector<16x128xf32>
    %cst = arith.constant 2.000000e+00 : f32
    %9 = vector.broadcast %cst : f32 to vector<16x128xf32>
    %10 = arith.mulf %9, %8 : vector<16x128xf32>
    %cst_0 = arith.constant -1.500000e+01 : f32
    %11 = vector.broadcast %cst_0 : f32 to vector<16x128xf32>
    %12 = arith.addf %10, %11 : vector<16x128xf32>
    %cst_1 = arith.constant 6.250000e-02 : f32
    %13 = vector.broadcast %cst_1 : f32 to vector<16x128xf32>
    %14 = arith.mulf %12, %13 : vector<16x128xf32>
    %15 = arith.sitofp %7 : vector<16x128xi32> to vector<16x128xf32>
    %cst_2 = arith.constant 2.000000e+00 : f32
    %16 = vector.broadcast %cst_2 : f32 to vector<16x128xf32>
    %17 = arith.mulf %16, %15 : vector<16x128xf32>
    %cst_3 = arith.constant -1.500000e+01 : f32
    %18 = vector.broadcast %cst_3 : f32 to vector<16x128xf32>
    %19 = arith.addf %17, %18 : vector<16x128xf32>
    %cst_4 = arith.constant 6.250000e-02 : f32
    %20 = vector.broadcast %cst_4 : f32 to vector<16x128xf32>
    %21 = arith.mulf %19, %20 : vector<16x128xf32>
    %22 = arith.sitofp %0 : i32 to f32
    %23 = arith.sitofp %1 : i32 to f32
    %cst_5 = arith.constant 2.000000e+00 : f32
    %24 = arith.mulf %cst_5, %22 : f32
    %cst_6 = arith.constant -1.500000e+01 : f32
    %25 = arith.addf %24, %cst_6 : f32
    %cst_7 = arith.constant 6.250000e-02 : f32
    %26 = arith.mulf %25, %cst_7 : f32
    %cst_8 = arith.constant 1.500000e+01 : f32
    %27 = arith.addf %22, %cst_8 : f32
    %cst_9 = arith.constant 2.000000e+00 : f32
    %28 = arith.mulf %cst_9, %27 : f32
    %cst_10 = arith.constant -1.500000e+01 : f32
    %29 = arith.addf %28, %cst_10 : f32
    %cst_11 = arith.constant 6.250000e-02 : f32
    %30 = arith.mulf %29, %cst_11 : f32
    %cst_12 = arith.constant 2.000000e+00 : f32
    %31 = arith.mulf %cst_12, %23 : f32
    %cst_13 = arith.constant -1.500000e+01 : f32
    %32 = arith.addf %31, %cst_13 : f32
    %cst_14 = arith.constant 6.250000e-02 : f32
    %33 = arith.mulf %32, %cst_14 : f32
    %cst_15 = arith.constant 1.270000e+02 : f32
    %34 = arith.addf %23, %cst_15 : f32
    %cst_16 = arith.constant 2.000000e+00 : f32
    %35 = arith.mulf %cst_16, %34 : f32
    %cst_17 = arith.constant -1.500000e+01 : f32
    %36 = arith.addf %35, %cst_17 : f32
    %cst_18 = arith.constant 6.250000e-02 : f32
    %37 = arith.mulf %36, %cst_18 : f32
    %c8_i32 = arith.constant 8 : i32
    %38 = arith.muli %arg0, %c8_i32 : i32
    %cst_19 = arith.constant 1.000000e+02 : f32
    %39 = vector.broadcast %cst_19 : f32 to vector<16x128xf32>
    %cst_20 = arith.constant 0.000000e+00 : f32
    %40 = vector.broadcast %cst_20 : f32 to vector<16x128xf32>
    %cst_21 = arith.constant 0.000000e+00 : f32
    %41 = vector.broadcast %cst_21 : f32 to vector<16x128xf32>
    %cst_22 = arith.constant 0.000000e+00 : f32
    %42 = vector.broadcast %cst_22 : f32 to vector<16x128xf32>
    %cst_23 = arith.constant 0.000000e+00 : f32
    %43 = vector.broadcast %cst_23 : f32 to vector<16x128xf32>
    %c0_i32 = arith.constant 0 : i32
    %c4_i32 = arith.constant 4 : i32
    %44 = arith.addi %c0_i32, %c4_i32 : i32
    %c1_i32 = arith.constant 1 : i32
    %45:5 = scf.for %arg8 = %c0_i32 to %44 step %c1_i32 iter_args(%arg9 = %39, %arg10 = %40, %arg11 = %41, %arg12 = %42, %arg13 = %43) -> (vector<16x128xf32>, vector<16x128xf32>, vector<16x128xf32>, vector<16x128xf32>, vector<16x128xf32>)  : i32 {
      %c2_i32 = arith.constant 2 : i32
      %61 = arith.muli %arg8, %c2_i32 : i32
      %c0_i32_40 = arith.constant 0 : i32
      %62 = arith.addi %61, %c0_i32_40 : i32
      %63 = arith.addi %38, %62 : i32
      %c4_i32_41 = arith.constant 4 : i32
      %64 = arith.muli %63, %c4_i32_41 : i32
      %c0_i32_42 = arith.constant 0 : i32
      %65 = arith.addi %64, %c0_i32_42 : i32
      %66 = arith.index_cast %65 : i32 to index
      %67 = memref.load %arg3[%66] : memref<64xf32, #tpu.memory_space<smem>>
      %c1_i32_43 = arith.constant 1 : i32
      %68 = arith.addi %64, %c1_i32_43 : i32
      %69 = arith.index_cast %68 : i32 to index
      %70 = memref.load %arg3[%69] : memref<64xf32, #tpu.memory_space<smem>>
      %c2_i32_44 = arith.constant 2 : i32
      %71 = arith.addi %64, %c2_i32_44 : i32
      %72 = arith.index_cast %71 : i32 to index
      %73 = memref.load %arg3[%72] : memref<64xf32, #tpu.memory_space<smem>>
      %c3_i32 = arith.constant 3 : i32
      %74 = arith.addi %64, %c3_i32 : i32
      %75 = arith.index_cast %74 : i32 to index
      %76 = memref.load %arg3[%75] : memref<64xf32, #tpu.memory_space<smem>>
      %77 = arith.cmpf oge, %70, %33 : f32
      %78 = arith.cmpf ole, %67, %37 : f32
      %79 = arith.andi %77, %78 : i1
      %80 = arith.cmpf oge, %76, %26 : f32
      %81 = arith.andi %79, %80 : i1
      %82 = arith.cmpf ole, %73, %30 : f32
      %83 = arith.andi %81, %82 : i1
      %84 = arith.extui %83 : i1 to i32
      %c0_i32_45 = arith.constant 0 : i32
      %85 = arith.cmpi ne, %84, %c0_i32_45 : i32
      %86:5 = scf.if %85 -> (vector<16x128xf32>, vector<16x128xf32>, vector<16x128xf32>, vector<16x128xf32>, vector<16x128xf32>) {
        %112 = arith.addi %38, %62 : i32
        %c18_i32 = arith.constant 18 : i32
        %113 = arith.muli %112, %c18_i32 : i32
        %c0_i32_53 = arith.constant 0 : i32
        %114 = arith.addi %113, %c0_i32_53 : i32
        %115 = arith.index_cast %114 : i32 to index
        %116 = memref.load %arg4[%115] : memref<288xf32, #tpu.memory_space<smem>>
        %c1_i32_54 = arith.constant 1 : i32
        %117 = arith.addi %113, %c1_i32_54 : i32
        %118 = arith.index_cast %117 : i32 to index
        %119 = memref.load %arg4[%118] : memref<288xf32, #tpu.memory_space<smem>>
        %c2_i32_55 = arith.constant 2 : i32
        %120 = arith.addi %113, %c2_i32_55 : i32
        %121 = arith.index_cast %120 : i32 to index
        %122 = memref.load %arg4[%121] : memref<288xf32, #tpu.memory_space<smem>>
        %c3_i32_56 = arith.constant 3 : i32
        %123 = arith.addi %113, %c3_i32_56 : i32
        %124 = arith.index_cast %123 : i32 to index
        %125 = memref.load %arg4[%124] : memref<288xf32, #tpu.memory_space<smem>>
        %c4_i32_57 = arith.constant 4 : i32
        %126 = arith.addi %113, %c4_i32_57 : i32
        %127 = arith.index_cast %126 : i32 to index
        %128 = memref.load %arg4[%127] : memref<288xf32, #tpu.memory_space<smem>>
        %c5_i32 = arith.constant 5 : i32
        %129 = arith.addi %113, %c5_i32 : i32
        %130 = arith.index_cast %129 : i32 to index
        %131 = memref.load %arg4[%130] : memref<288xf32, #tpu.memory_space<smem>>
        %c6_i32 = arith.constant 6 : i32
        %132 = arith.addi %113, %c6_i32 : i32
        %133 = arith.index_cast %132 : i32 to index
        %134 = memref.load %arg4[%133] : memref<288xf32, #tpu.memory_space<smem>>
        %c7_i32 = arith.constant 7 : i32
        %135 = arith.addi %113, %c7_i32 : i32
        %136 = arith.index_cast %135 : i32 to index
        %137 = memref.load %arg4[%136] : memref<288xf32, #tpu.memory_space<smem>>
        %c8_i32_58 = arith.constant 8 : i32
        %138 = arith.addi %113, %c8_i32_58 : i32
        %139 = arith.index_cast %138 : i32 to index
        %140 = memref.load %arg4[%139] : memref<288xf32, #tpu.memory_space<smem>>
        %c9_i32 = arith.constant 9 : i32
        %141 = arith.addi %113, %c9_i32 : i32
        %142 = arith.index_cast %141 : i32 to index
        %143 = memref.load %arg4[%142] : memref<288xf32, #tpu.memory_space<smem>>
        %c10_i32 = arith.constant 10 : i32
        %144 = arith.addi %113, %c10_i32 : i32
        %145 = arith.index_cast %144 : i32 to index
        %146 = memref.load %arg4[%145] : memref<288xf32, #tpu.memory_space<smem>>
        %c11_i32 = arith.constant 11 : i32
        %147 = arith.addi %113, %c11_i32 : i32
        %148 = arith.index_cast %147 : i32 to index
        %149 = memref.load %arg4[%148] : memref<288xf32, #tpu.memory_space<smem>>
        %c12_i32 = arith.constant 12 : i32
        %150 = arith.addi %113, %c12_i32 : i32
        %151 = arith.index_cast %150 : i32 to index
        %152 = memref.load %arg4[%151] : memref<288xf32, #tpu.memory_space<smem>>
        %c13_i32 = arith.constant 13 : i32
        %153 = arith.addi %113, %c13_i32 : i32
        %154 = arith.index_cast %153 : i32 to index
        %155 = memref.load %arg4[%154] : memref<288xf32, #tpu.memory_space<smem>>
        %c14_i32 = arith.constant 14 : i32
        %156 = arith.addi %113, %c14_i32 : i32
        %157 = arith.index_cast %156 : i32 to index
        %158 = memref.load %arg4[%157] : memref<288xf32, #tpu.memory_space<smem>>
        %c15_i32 = arith.constant 15 : i32
        %159 = arith.addi %113, %c15_i32 : i32
        %160 = arith.index_cast %159 : i32 to index
        %161 = memref.load %arg4[%160] : memref<288xf32, #tpu.memory_space<smem>>
        %c16_i32_59 = arith.constant 16 : i32
        %162 = arith.addi %113, %c16_i32_59 : i32
        %163 = arith.index_cast %162 : i32 to index
        %164 = memref.load %arg4[%163] : memref<288xf32, #tpu.memory_space<smem>>
        %c17_i32 = arith.constant 17 : i32
        %165 = arith.addi %113, %c17_i32 : i32
        %166 = arith.index_cast %165 : i32 to index
        %167 = memref.load %arg4[%166] : memref<288xf32, #tpu.memory_space<smem>>
        %168 = vector.broadcast %116 : f32 to vector<16x128xf32>
        %169 = arith.mulf %168, %21 : vector<16x128xf32>
        %170 = vector.broadcast %119 : f32 to vector<16x128xf32>
        %171 = arith.mulf %170, %14 : vector<16x128xf32>
        %172 = arith.addf %169, %171 : vector<16x128xf32>
        %173 = vector.broadcast %122 : f32 to vector<16x128xf32>
        %174 = arith.addf %172, %173 : vector<16x128xf32>
        %175 = vector.broadcast %125 : f32 to vector<16x128xf32>
        %176 = arith.mulf %175, %21 : vector<16x128xf32>
        %177 = vector.broadcast %128 : f32 to vector<16x128xf32>
        %178 = arith.mulf %177, %14 : vector<16x128xf32>
        %179 = arith.addf %176, %178 : vector<16x128xf32>
        %180 = vector.broadcast %131 : f32 to vector<16x128xf32>
        %181 = arith.addf %179, %180 : vector<16x128xf32>
        %cst_60 = arith.constant 1.000000e+00 : f32
        %182 = vector.broadcast %cst_60 : f32 to vector<16x128xf32>
        %183 = arith.subf %182, %174 : vector<16x128xf32>
        %184 = arith.subf %183, %181 : vector<16x128xf32>
        %cst_61 = arith.constant 0.000000e+00 : f32
        %185 = vector.broadcast %cst_61 : f32 to vector<16x128xf32>
        %186 = arith.cmpf oge, %174, %185 : vector<16x128xf32>
        %cst_62 = arith.constant 0.000000e+00 : f32
        %187 = vector.broadcast %cst_62 : f32 to vector<16x128xf32>
        %188 = arith.cmpf oge, %181, %187 : vector<16x128xf32>
        %189 = arith.andi %186, %188 : vector<16x128xi1>
        %cst_63 = arith.constant 0.000000e+00 : f32
        %190 = vector.broadcast %cst_63 : f32 to vector<16x128xf32>
        %191 = arith.cmpf oge, %184, %190 : vector<16x128xf32>
        %192 = arith.andi %189, %191 : vector<16x128xi1>
        %193 = vector.broadcast %134 : f32 to vector<16x128xf32>
        %194 = arith.mulf %174, %193 : vector<16x128xf32>
        %195 = vector.broadcast %137 : f32 to vector<16x128xf32>
        %196 = arith.mulf %181, %195 : vector<16x128xf32>
        %197 = vector.broadcast %140 : f32 to vector<16x128xf32>
        %198 = arith.mulf %184, %197 : vector<16x128xf32>
        %199 = arith.addf %194, %196 : vector<16x128xf32>
        %200 = arith.addf %199, %198 : vector<16x128xf32>
        %cst_64 = arith.constant 9.99999993E-9 : f32
        %201 = vector.broadcast %cst_64 : f32 to vector<16x128xf32>
        %202 = arith.maximumf %200, %201 : vector<16x128xf32>
        %203 = tpu.reciprocal %202 {approx = true} : vector<16x128xf32> -> vector<16x128xf32>
        %204 = arith.mulf %202, %203 : vector<16x128xf32>
        %cst_65 = arith.constant 2.000000e+00 : f32
        %205 = vector.broadcast %cst_65 : f32 to vector<16x128xf32>
        %206 = arith.subf %205, %204 : vector<16x128xf32>
        %207 = arith.mulf %203, %206 : vector<16x128xf32>
        %cst_66 = arith.constant 1.000000e-01 : f32
        %208 = vector.broadcast %cst_66 : f32 to vector<16x128xf32>
        %209 = arith.cmpf ogt, %207, %208 : vector<16x128xf32>
        %210 = arith.andi %192, %209 : vector<16x128xi1>
        %cst_67 = arith.constant 1.000000e+02 : f32
        %211 = vector.broadcast %cst_67 : f32 to vector<16x128xf32>
        %212 = arith.cmpf olt, %207, %211 : vector<16x128xf32>
        %213 = arith.andi %210, %212 : vector<16x128xi1>
        %214 = arith.cmpf olt, %207, %arg9 : vector<16x128xf32>
        %215 = arith.andi %213, %214 : vector<16x128xi1>
        %216 = arith.mulf %194, %207 : vector<16x128xf32>
        %217 = arith.mulf %196, %207 : vector<16x128xf32>
        %218 = arith.mulf %198, %207 : vector<16x128xf32>
        %219 = arith.select %215, %207, %arg9 : vector<16x128xi1>, vector<16x128xf32>
        %cst_68 = arith.constant 1.000000e+00 : f32
        %220 = vector.broadcast %cst_68 : f32 to vector<16x128xf32>
        %221 = arith.select %215, %220, %arg10 : vector<16x128xi1>, vector<16x128xf32>
        %222 = vector.broadcast %143 : f32 to vector<16x128xf32>
        %223 = arith.mulf %216, %222 : vector<16x128xf32>
        %224 = vector.broadcast %152 : f32 to vector<16x128xf32>
        %225 = arith.mulf %217, %224 : vector<16x128xf32>
        %226 = arith.addf %223, %225 : vector<16x128xf32>
        %227 = vector.broadcast %161 : f32 to vector<16x128xf32>
        %228 = arith.mulf %218, %227 : vector<16x128xf32>
        %229 = arith.addf %226, %228 : vector<16x128xf32>
        %230 = arith.select %215, %229, %arg11 : vector<16x128xi1>, vector<16x128xf32>
        %231 = vector.broadcast %146 : f32 to vector<16x128xf32>
        %232 = arith.mulf %216, %231 : vector<16x128xf32>
        %233 = vector.broadcast %155 : f32 to vector<16x128xf32>
        %234 = arith.mulf %217, %233 : vector<16x128xf32>
        %235 = arith.addf %232, %234 : vector<16x128xf32>
        %236 = vector.broadcast %164 : f32 to vector<16x128xf32>
        %237 = arith.mulf %218, %236 : vector<16x128xf32>
        %238 = arith.addf %235, %237 : vector<16x128xf32>
        %239 = arith.select %215, %238, %arg12 : vector<16x128xi1>, vector<16x128xf32>
        %240 = vector.broadcast %149 : f32 to vector<16x128xf32>
        %241 = arith.mulf %216, %240 : vector<16x128xf32>
        %242 = vector.broadcast %158 : f32 to vector<16x128xf32>
        %243 = arith.mulf %217, %242 : vector<16x128xf32>
        %244 = arith.addf %241, %243 : vector<16x128xf32>
        %245 = vector.broadcast %167 : f32 to vector<16x128xf32>
        %246 = arith.mulf %218, %245 : vector<16x128xf32>
        %247 = arith.addf %244, %246 : vector<16x128xf32>
        %248 = arith.select %215, %247, %arg13 : vector<16x128xi1>, vector<16x128xf32>
        scf.yield %219, %221, %230, %239, %248 : vector<16x128xf32>, vector<16x128xf32>, vector<16x128xf32>, vector<16x128xf32>, vector<16x128xf32>
      } else {
        scf.yield %arg9, %arg10, %arg11, %arg12, %arg13 : vector<16x128xf32>, vector<16x128xf32>, vector<16x128xf32>, vector<16x128xf32>, vector<16x128xf32>
      }
      %c1_i32_46 = arith.constant 1 : i32
      %87 = arith.addi %61, %c1_i32_46 : i32
      %88 = arith.addi %38, %87 : i32
      %c4_i32_47 = arith.constant 4 : i32
      %89 = arith.muli %88, %c4_i32_47 : i32
      %c0_i32_48 = arith.constant 0 : i32
      %90 = arith.addi %89, %c0_i32_48 : i32
      %91 = arith.index_cast %90 : i32 to index
      %92 = memref.load %arg3[%91] : memref<64xf32, #tpu.memory_space<smem>>
      %c1_i32_49 = arith.constant 1 : i32
      %93 = arith.addi %89, %c1_i32_49 : i32
      %94 = arith.index_cast %93 : i32 to index
      %95 = memref.load %arg3[%94] : memref<64xf32, #tpu.memory_space<smem>>
      %c2_i32_50 = arith.constant 2 : i32
      %96 = arith.addi %89, %c2_i32_50 : i32
      %97 = arith.index_cast %96 : i32 to index
      %98 = memref.load %arg3[%97] : memref<64xf32, #tpu.memory_space<smem>>
      %c3_i32_51 = arith.constant 3 : i32
      %99 = arith.addi %89, %c3_i32_51 : i32
      %100 = arith.index_cast %99 : i32 to index
      %101 = memref.load %arg3[%100] : memref<64xf32, #tpu.memory_space<smem>>
      %102 = arith.cmpf oge, %95, %33 : f32
      %103 = arith.cmpf ole, %92, %37 : f32
      %104 = arith.andi %102, %103 : i1
      %105 = arith.cmpf oge, %101, %26 : f32
      %106 = arith.andi %104, %105 : i1
      %107 = arith.cmpf ole, %98, %30 : f32
      %108 = arith.andi %106, %107 : i1
      %109 = arith.extui %108 : i1 to i32
      %c0_i32_52 = arith.constant 0 : i32
      %110 = arith.cmpi ne, %109, %c0_i32_52 : i32
      %111:5 = scf.if %110 -> (vector<16x128xf32>, vector<16x128xf32>, vector<16x128xf32>, vector<16x128xf32>, vector<16x128xf32>) {
        %112 = arith.addi %38, %87 : i32
        %c18_i32 = arith.constant 18 : i32
        %113 = arith.muli %112, %c18_i32 : i32
        %c0_i32_53 = arith.constant 0 : i32
        %114 = arith.addi %113, %c0_i32_53 : i32
        %115 = arith.index_cast %114 : i32 to index
        %116 = memref.load %arg4[%115] : memref<288xf32, #tpu.memory_space<smem>>
        %c1_i32_54 = arith.constant 1 : i32
        %117 = arith.addi %113, %c1_i32_54 : i32
        %118 = arith.index_cast %117 : i32 to index
        %119 = memref.load %arg4[%118] : memref<288xf32, #tpu.memory_space<smem>>
        %c2_i32_55 = arith.constant 2 : i32
        %120 = arith.addi %113, %c2_i32_55 : i32
        %121 = arith.index_cast %120 : i32 to index
        %122 = memref.load %arg4[%121] : memref<288xf32, #tpu.memory_space<smem>>
        %c3_i32_56 = arith.constant 3 : i32
        %123 = arith.addi %113, %c3_i32_56 : i32
        %124 = arith.index_cast %123 : i32 to index
        %125 = memref.load %arg4[%124] : memref<288xf32, #tpu.memory_space<smem>>
        %c4_i32_57 = arith.constant 4 : i32
        %126 = arith.addi %113, %c4_i32_57 : i32
        %127 = arith.index_cast %126 : i32 to index
        %128 = memref.load %arg4[%127] : memref<288xf32, #tpu.memory_space<smem>>
        %c5_i32 = arith.constant 5 : i32
        %129 = arith.addi %113, %c5_i32 : i32
        %130 = arith.index_cast %129 : i32 to index
        %131 = memref.load %arg4[%130] : memref<288xf32, #tpu.memory_space<smem>>
        %c6_i32 = arith.constant 6 : i32
        %132 = arith.addi %113, %c6_i32 : i32
        %133 = arith.index_cast %132 : i32 to index
        %134 = memref.load %arg4[%133] : memref<288xf32, #tpu.memory_space<smem>>
        %c7_i32 = arith.constant 7 : i32
        %135 = arith.addi %113, %c7_i32 : i32
        %136 = arith.index_cast %135 : i32 to index
        %137 = memref.load %arg4[%136] : memref<288xf32, #tpu.memory_space<smem>>
        %c8_i32_58 = arith.constant 8 : i32
        %138 = arith.addi %113, %c8_i32_58 : i32
        %139 = arith.index_cast %138 : i32 to index
        %140 = memref.load %arg4[%139] : memref<288xf32, #tpu.memory_space<smem>>
        %c9_i32 = arith.constant 9 : i32
        %141 = arith.addi %113, %c9_i32 : i32
        %142 = arith.index_cast %141 : i32 to index
        %143 = memref.load %arg4[%142] : memref<288xf32, #tpu.memory_space<smem>>
        %c10_i32 = arith.constant 10 : i32
        %144 = arith.addi %113, %c10_i32 : i32
        %145 = arith.index_cast %144 : i32 to index
        %146 = memref.load %arg4[%145] : memref<288xf32, #tpu.memory_space<smem>>
        %c11_i32 = arith.constant 11 : i32
        %147 = arith.addi %113, %c11_i32 : i32
        %148 = arith.index_cast %147 : i32 to index
        %149 = memref.load %arg4[%148] : memref<288xf32, #tpu.memory_space<smem>>
        %c12_i32 = arith.constant 12 : i32
        %150 = arith.addi %113, %c12_i32 : i32
        %151 = arith.index_cast %150 : i32 to index
        %152 = memref.load %arg4[%151] : memref<288xf32, #tpu.memory_space<smem>>
        %c13_i32 = arith.constant 13 : i32
        %153 = arith.addi %113, %c13_i32 : i32
        %154 = arith.index_cast %153 : i32 to index
        %155 = memref.load %arg4[%154] : memref<288xf32, #tpu.memory_space<smem>>
        %c14_i32 = arith.constant 14 : i32
        %156 = arith.addi %113, %c14_i32 : i32
        %157 = arith.index_cast %156 : i32 to index
        %158 = memref.load %arg4[%157] : memref<288xf32, #tpu.memory_space<smem>>
        %c15_i32 = arith.constant 15 : i32
        %159 = arith.addi %113, %c15_i32 : i32
        %160 = arith.index_cast %159 : i32 to index
        %161 = memref.load %arg4[%160] : memref<288xf32, #tpu.memory_space<smem>>
        %c16_i32_59 = arith.constant 16 : i32
        %162 = arith.addi %113, %c16_i32_59 : i32
        %163 = arith.index_cast %162 : i32 to index
        %164 = memref.load %arg4[%163] : memref<288xf32, #tpu.memory_space<smem>>
        %c17_i32 = arith.constant 17 : i32
        %165 = arith.addi %113, %c17_i32 : i32
        %166 = arith.index_cast %165 : i32 to index
        %167 = memref.load %arg4[%166] : memref<288xf32, #tpu.memory_space<smem>>
        %168 = vector.broadcast %116 : f32 to vector<16x128xf32>
        %169 = arith.mulf %168, %21 : vector<16x128xf32>
        %170 = vector.broadcast %119 : f32 to vector<16x128xf32>
        %171 = arith.mulf %170, %14 : vector<16x128xf32>
        %172 = arith.addf %169, %171 : vector<16x128xf32>
        %173 = vector.broadcast %122 : f32 to vector<16x128xf32>
        %174 = arith.addf %172, %173 : vector<16x128xf32>
        %175 = vector.broadcast %125 : f32 to vector<16x128xf32>
        %176 = arith.mulf %175, %21 : vector<16x128xf32>
        %177 = vector.broadcast %128 : f32 to vector<16x128xf32>
        %178 = arith.mulf %177, %14 : vector<16x128xf32>
        %179 = arith.addf %176, %178 : vector<16x128xf32>
        %180 = vector.broadcast %131 : f32 to vector<16x128xf32>
        %181 = arith.addf %179, %180 : vector<16x128xf32>
        %cst_60 = arith.constant 1.000000e+00 : f32
        %182 = vector.broadcast %cst_60 : f32 to vector<16x128xf32>
        %183 = arith.subf %182, %174 : vector<16x128xf32>
        %184 = arith.subf %183, %181 : vector<16x128xf32>
        %cst_61 = arith.constant 0.000000e+00 : f32
        %185 = vector.broadcast %cst_61 : f32 to vector<16x128xf32>
        %186 = arith.cmpf oge, %174, %185 : vector<16x128xf32>
        %cst_62 = arith.constant 0.000000e+00 : f32
        %187 = vector.broadcast %cst_62 : f32 to vector<16x128xf32>
        %188 = arith.cmpf oge, %181, %187 : vector<16x128xf32>
        %189 = arith.andi %186, %188 : vector<16x128xi1>
        %cst_63 = arith.constant 0.000000e+00 : f32
        %190 = vector.broadcast %cst_63 : f32 to vector<16x128xf32>
        %191 = arith.cmpf oge, %184, %190 : vector<16x128xf32>
        %192 = arith.andi %189, %191 : vector<16x128xi1>
        %193 = vector.broadcast %134 : f32 to vector<16x128xf32>
        %194 = arith.mulf %174, %193 : vector<16x128xf32>
        %195 = vector.broadcast %137 : f32 to vector<16x128xf32>
        %196 = arith.mulf %181, %195 : vector<16x128xf32>
        %197 = vector.broadcast %140 : f32 to vector<16x128xf32>
        %198 = arith.mulf %184, %197 : vector<16x128xf32>
        %199 = arith.addf %194, %196 : vector<16x128xf32>
        %200 = arith.addf %199, %198 : vector<16x128xf32>
        %cst_64 = arith.constant 9.99999993E-9 : f32
        %201 = vector.broadcast %cst_64 : f32 to vector<16x128xf32>
        %202 = arith.maximumf %200, %201 : vector<16x128xf32>
        %203 = tpu.reciprocal %202 {approx = true} : vector<16x128xf32> -> vector<16x128xf32>
        %204 = arith.mulf %202, %203 : vector<16x128xf32>
        %cst_65 = arith.constant 2.000000e+00 : f32
        %205 = vector.broadcast %cst_65 : f32 to vector<16x128xf32>
        %206 = arith.subf %205, %204 : vector<16x128xf32>
        %207 = arith.mulf %203, %206 : vector<16x128xf32>
        %cst_66 = arith.constant 1.000000e-01 : f32
        %208 = vector.broadcast %cst_66 : f32 to vector<16x128xf32>
        %209 = arith.cmpf ogt, %207, %208 : vector<16x128xf32>
        %210 = arith.andi %192, %209 : vector<16x128xi1>
        %cst_67 = arith.constant 1.000000e+02 : f32
        %211 = vector.broadcast %cst_67 : f32 to vector<16x128xf32>
        %212 = arith.cmpf olt, %207, %211 : vector<16x128xf32>
        %213 = arith.andi %210, %212 : vector<16x128xi1>
        %214 = arith.cmpf olt, %207, %86#0 : vector<16x128xf32>
        %215 = arith.andi %213, %214 : vector<16x128xi1>
        %216 = arith.mulf %194, %207 : vector<16x128xf32>
        %217 = arith.mulf %196, %207 : vector<16x128xf32>
        %218 = arith.mulf %198, %207 : vector<16x128xf32>
        %219 = arith.select %215, %207, %86#0 : vector<16x128xi1>, vector<16x128xf32>
        %cst_68 = arith.constant 1.000000e+00 : f32
        %220 = vector.broadcast %cst_68 : f32 to vector<16x128xf32>
        %221 = arith.select %215, %220, %86#1 : vector<16x128xi1>, vector<16x128xf32>
        %222 = vector.broadcast %143 : f32 to vector<16x128xf32>
        %223 = arith.mulf %216, %222 : vector<16x128xf32>
        %224 = vector.broadcast %152 : f32 to vector<16x128xf32>
        %225 = arith.mulf %217, %224 : vector<16x128xf32>
        %226 = arith.addf %223, %225 : vector<16x128xf32>
        %227 = vector.broadcast %161 : f32 to vector<16x128xf32>
        %228 = arith.mulf %218, %227 : vector<16x128xf32>
        %229 = arith.addf %226, %228 : vector<16x128xf32>
        %230 = arith.select %215, %229, %86#2 : vector<16x128xi1>, vector<16x128xf32>
        %231 = vector.broadcast %146 : f32 to vector<16x128xf32>
        %232 = arith.mulf %216, %231 : vector<16x128xf32>
        %233 = vector.broadcast %155 : f32 to vector<16x128xf32>
        %234 = arith.mulf %217, %233 : vector<16x128xf32>
        %235 = arith.addf %232, %234 : vector<16x128xf32>
        %236 = vector.broadcast %164 : f32 to vector<16x128xf32>
        %237 = arith.mulf %218, %236 : vector<16x128xf32>
        %238 = arith.addf %235, %237 : vector<16x128xf32>
        %239 = arith.select %215, %238, %86#3 : vector<16x128xi1>, vector<16x128xf32>
        %240 = vector.broadcast %149 : f32 to vector<16x128xf32>
        %241 = arith.mulf %216, %240 : vector<16x128xf32>
        %242 = vector.broadcast %158 : f32 to vector<16x128xf32>
        %243 = arith.mulf %217, %242 : vector<16x128xf32>
        %244 = arith.addf %241, %243 : vector<16x128xf32>
        %245 = vector.broadcast %167 : f32 to vector<16x128xf32>
        %246 = arith.mulf %218, %245 : vector<16x128xf32>
        %247 = arith.addf %244, %246 : vector<16x128xf32>
        %248 = arith.select %215, %247, %86#4 : vector<16x128xi1>, vector<16x128xf32>
        scf.yield %219, %221, %230, %239, %248 : vector<16x128xf32>, vector<16x128xf32>, vector<16x128xf32>, vector<16x128xf32>, vector<16x128xf32>
      } else {
        scf.yield %86#0, %86#1, %86#2, %86#3, %86#4 : vector<16x128xf32>, vector<16x128xf32>, vector<16x128xf32>, vector<16x128xf32>, vector<16x128xf32>
      }
      scf.yield %111#0, %111#1, %111#2, %111#3, %111#4 : vector<16x128xf32>, vector<16x128xf32>, vector<16x128xf32>, vector<16x128xf32>, vector<16x128xf32>
    }
    %c4_i32_24 = arith.constant 4 : i32
    %c0 = arith.constant 0 : index
    %c0_25 = arith.constant 0 : index
    %c0_26 = arith.constant 0 : index
    %c0_27 = arith.constant 0 : index
    %46 = vector.load %arg5[%c0, %c0_25, %c0_26, %c0_27] : memref<1x3x16x128xf32, #tpu.memory_space<vmem>>, vector<1x1x16x128xf32>
    %47 = vector.shape_cast %46 : vector<1x1x16x128xf32> to vector<16x128xf32>
    %48 = vector.shape_cast %45#2 : vector<16x128xf32> to vector<1x1x16x128xf32>
    tpu.vector_store %arg5[%c0, %c0_25, %c0_26, %c0_27], %48 {strides = array<i32>} : memref<1x3x16x128xf32, #tpu.memory_space<vmem>>, vector<1x1x16x128xf32>,
    %c0_28 = arith.constant 0 : index
    %c1 = arith.constant 1 : index
    %c0_29 = arith.constant 0 : index
    %c0_30 = arith.constant 0 : index
    %49 = vector.load %arg5[%c0_28, %c1, %c0_29, %c0_30] : memref<1x3x16x128xf32, #tpu.memory_space<vmem>>, vector<1x1x16x128xf32>
    %50 = vector.shape_cast %49 : vector<1x1x16x128xf32> to vector<16x128xf32>
    %51 = vector.shape_cast %45#3 : vector<16x128xf32> to vector<1x1x16x128xf32>
    tpu.vector_store %arg5[%c0_28, %c1, %c0_29, %c0_30], %51 {strides = array<i32>} : memref<1x3x16x128xf32, #tpu.memory_space<vmem>>, vector<1x1x16x128xf32>,
    %c0_31 = arith.constant 0 : index
    %c2 = arith.constant 2 : index
    %c0_32 = arith.constant 0 : index
    %c0_33 = arith.constant 0 : index
    %52 = vector.load %arg5[%c0_31, %c2, %c0_32, %c0_33] : memref<1x3x16x128xf32, #tpu.memory_space<vmem>>, vector<1x1x16x128xf32>
    %53 = vector.shape_cast %52 : vector<1x1x16x128xf32> to vector<16x128xf32>
    %54 = vector.shape_cast %45#4 : vector<16x128xf32> to vector<1x1x16x128xf32>
    tpu.vector_store %arg5[%c0_31, %c2, %c0_32, %c0_33], %54 {strides = array<i32>} : memref<1x3x16x128xf32, #tpu.memory_space<vmem>>, vector<1x1x16x128xf32>,
    %c0_34 = arith.constant 0 : index
    %c0_35 = arith.constant 0 : index
    %c0_36 = arith.constant 0 : index
    %55 = vector.load %arg6[%c0_34, %c0_35, %c0_36] : memref<1x16x128xf32, #tpu.memory_space<vmem>>, vector<1x16x128xf32>
    %56 = vector.shape_cast %55 : vector<1x16x128xf32> to vector<16x128xf32>
    %57 = vector.shape_cast %45#1 : vector<16x128xf32> to vector<1x16x128xf32>
    tpu.vector_store %arg6[%c0_34, %c0_35, %c0_36], %57 {strides = array<i32>} : memref<1x16x128xf32, #tpu.memory_space<vmem>>, vector<1x16x128xf32>,
    %c0_37 = arith.constant 0 : index
    %c0_38 = arith.constant 0 : index
    %c0_39 = arith.constant 0 : index
    %58 = vector.load %arg7[%c0_37, %c0_38, %c0_39] : memref<1x16x128xf32, #tpu.memory_space<vmem>>, vector<1x16x128xf32>
    %59 = vector.shape_cast %58 : vector<1x16x128xf32> to vector<16x128xf32>
    %60 = vector.shape_cast %45#0 : vector<16x128xf32> to vector<1x16x128xf32>
    tpu.vector_store %arg7[%c0_37, %c0_38, %c0_39], %60 {strides = array<i32>} : memref<1x16x128xf32, #tpu.memory_space<vmem>>, vector<1x16x128xf32>,
    return
  }
  func.func @transform_0(%arg0: i32, %arg1: i32, %arg2: i32) -> i32 {
    %c0_i32 = arith.constant 0 : i32
    %c0_i32_0 = arith.constant 0 : i32
    return %c0_i32 : i32
  }
  func.func @transform_1(%arg0: i32, %arg1: i32, %arg2: i32) -> i32 {
    %c0_i32 = arith.constant 0 : i32
    %c0_i32_0 = arith.constant 0 : i32
    return %c0_i32 : i32
  }
  func.func @transform_2(%arg0: i32, %arg1: i32, %arg2: i32) -> (i32, i32, i32, i32) {
    %c0_i32 = arith.constant 0 : i32
    %c0_i32_0 = arith.constant 0 : i32
    return %arg0, %c0_i32, %arg1, %arg2 : i32, i32, i32, i32
  }
  func.func @transform_3(%arg0: i32, %arg1: i32, %arg2: i32) -> (i32, i32, i32) {
    %c0_i32 = arith.constant 0 : i32
    return %arg0, %arg1, %arg2 : i32, i32, i32
  }
  func.func @transform_4(%arg0: i32, %arg1: i32, %arg2: i32) -> (i32, i32, i32) {
    %c0_i32 = arith.constant 0 : i32
    return %arg0, %arg1, %arg2 : i32, i32, i32
  }
}

</mosaic_0001>

<llo_original>
// kernel: render_pipeline.1
$region0: #{render_pipeline.1}
  #allocation0 [shape = 'u32[]', space=smem, size = 0x4, offset = 0x4, fixed_abs, tag = 'smem constant byte address 0x4 - core index']
  #allocation1 [shape = 'u32[144,128]{1,0:T(1,128)}', space=vmem, size = 0x12000, scoped, tag = 'internal scratch']
  %s0 = inlined_call_operand.vmem [shape: f32[64], index: 0, kind: input, shape index: {}]
  %s1 = inlined_call_operand.vmem [shape: f32[288], index: 1, kind: input, shape index: {}]
  %s2 = inlined_call_operand.vmem [shape: f32[2,3,16,128], index: 2, kind: output, shape index: {0}]
  %s3 = inlined_call_operand.hbm [shape: f32[2,16,128], index: 3, kind: output, shape index: {1}]
  %s4 = inlined_call_operand.hbm [shape: f32[2,16,128], index: 4, kind: output, shape index: {2}]
  %5 = xla_tuple %s2, %s3, %s4
  %s6 = sld [smem:[#allocation0]]
  $region88: #{render_pipeline.1} parent=0
    _
  %s8 = ssub.s32 1, %s6
  %s9 = scalar_select 0, %s8, %s6
  $region1: #{render_pipeline.1} parent=0
    #allocation2 [shape = 'u8[512]{0}', space=smem, size = 0x200, scoped, tag = 'input window, operand 0, single buffered']
    #allocation3 [shape = 's32[2]{0}', space=sflag, size = 0x8, scoped, tag = 'scoped memory for render_pipeline.1']
    #allocation4 [shape = 's32[2]{0}', space=sflag, size = 0x8, scoped, tag = 'scoped memory for render_pipeline.1']
    #allocation5 [shape = 'u8[1536]{0}', space=smem, size = 0x600, scoped, tag = 'input window, operand 1, single buffered']
    #allocation6 [shape = 's32[1]{0}', space=sflag, size = 0x4, scoped, tag = 'scoped memory for render_pipeline.1']
    #allocation7 [shape = 'u8[16384]{0}', space=vmem, size = 0x4000, scoped, tag = 'output window, operand 1']
    #allocation8 [shape = 'u8[16384]{0}', space=vmem, size = 0x4000, scoped, tag = 'output window, operand 2']
    #allocation9 [shape = 's32[2]{0}', space=sflag, size = 0x8, scoped, tag = 'scoped memory for render_pipeline.1']
    %10 = vsyncpa [#allocation4], 0
    %11 = vsyncpa [#allocation6], 0
    %12 = vsyncpa [#allocation3], 0
    %s13 = scalar_lea.sflag [#allocation3], 1
    %14 = vsyncpa %s13, 0
    %15 = vsyncpa [#allocation9], 0
    %s16 = scalar_lea.sflag [#allocation9], 1
    %17 = vsyncpa %s16, 0
    loop: start=0, step=1, limit=4
    $region2: #{render_pipeline.1} parent=1 // loop_pre_header
      _
    $region3: #{render_pipeline.1} parent=1 // loop_header
      %s19 = sphi 0, %s23
      %p20 = scmp.ge.s32.totalorder %s19, 4
      %s26 = sphi 0, %s45
      %s27 = sphi 0, %s41
      %s28 = sphi 0, %s37
      %s29 = sphi 0, %s26
      %s30 = sphi 0, %s27
      %s31 = sphi 0, %s28
      %s32 = sphi 0, %s29
      %s33 = sphi 0, %s30
      %s34 = sphi 0, %s31
      %s46 = sphi 0, %s46
      %s48 = sphi 0, %s46
      %s49 = sphi 0, %s48
      %s63 = sphi 0, %s49
      %s67 = sphi 0, %s67
      %s69 = sphi 0, %s67
      %s70 = sphi 0, %s69
      %s84 = sphi 0, %s70
      %s94 = sphi 0, %s96
      %s97 = sphi 0, %s94
      %s98 = sphi 0, %s97
      %s114 = sphi 0, %s98
      %s124 = sphi 0, %s126
      %s127 = sphi 0, %s124
      %s128 = sphi 0, %s127
      %s144 = sphi 0, %s128
      %s154 = sphi 0, %s156
      %s157 = sphi 0, %s154
      %s158 = sphi 0, %s157
      %s174 = sphi 0, %s158
    $region4: #{render_pipeline.1} parent=1 // loop_header_branch
      %22 = sbr.rel (%p20) target = $region8
    $region5: #{render_pipeline.1} parent=1 // loop_body
      %s24 = ssub.s32 %s19, 1
      %s25 = ssub.s32 %s19, 2
      %s35 = sadd.s32 1, %s28
      %p36 = scmp.ge.s32.totalorder %s35, 1
      %s37 = scalar_select %p36, 0, %s35
      %s38 = sadd.s32 1, %s27
      %s39 = scalar_select %p36, %s38, %s27
      %p40 = scmp.ge.s32.totalorder %s39, 1
      %s41 = scalar_select %p40, 0, %s39
      %s42 = sadd.s32 1, %s26
      %s43 = scalar_select %p40, %s42, %s26
      %p44 = scmp.ge.s32.totalorder %s43, 2
      %s45 = scalar_select %p44, 0, %s43
      %s47 = sadd.s32 %s46, 1
      %p50 = scmp.eq.s32.totalorder %s19, 1
      %p51 = scmp.ne.s32.totalorder %s46, %s48
      %p52 = scmp.eq.s32.totalorder %s19, 0
      %p53 = por %p51, %p52
      %p54 = scmp.ne.s32.totalorder %s46, %s48
      %p55 = scmp.eq.s32.totalorder %s24, 1
      %p56 = por %p54, %p55
      %p57 = scmp.ne.s32.totalorder %s48, %s49
      %p58 = scmp.eq.s32.totalorder %s24, 0
      %p59 = por %p57, %p58
      %p60 = scmp.ne.s32.totalorder %s48, %s49
      %p61 = scmp.eq.s32.totalorder %s25, 1
      %p62 = por %p60, %p61
      %p64 = scmp.ne.s32.totalorder %s49, %s63
      %p65 = scmp.eq.s32.totalorder %s25, 0
      %p66 = por %p64, %p65
      %s68 = sadd.s32 %s67, 1
      %p71 = scmp.eq.s32.totalorder %s19, 1
      %p72 = scmp.ne.s32.totalorder %s67, %s69
      %p73 = scmp.eq.s32.totalorder %s19, 0
      %p74 = por %p72, %p73
      %p75 = scmp.ne.s32.totalorder %s67, %s69
      %p76 = scmp.eq.s32.totalorder %s24, 1
      %p77 = por %p75, %p76
      %p78 = scmp.ne.s32.totalorder %s69, %s70
      %p79 = scmp.eq.s32.totalorder %s24, 0
      %p80 = por %p78, %p79
      %p81 = scmp.ne.s32.totalorder %s69, %s70
      %p82 = scmp.eq.s32.totalorder %s25, 1
      %p83 = por %p81, %p82
      %p85 = scmp.ne.s32.totalorder %s70, %s84
      %p86 = scmp.eq.s32.totalorder %s25, 0
      %p87 = por %p85, %p86
      %s88 = ssub.s32 %s26, %s45
      %s89 = ssub.s32 %s27, %s41
      %s90 = sor.u32 %s88, %s89
      %s91 = ssub.s32 %s28, %s37
      %s92 = sor.u32 %s90, %s91
      %p93 = scmp.eq.s32.totalorder %s92, 0
      %s95 = sadd.s32 %s94, 1
      %s96 = scalar_select %p93, %s94, %s95
      %p99 = pneg %p93
      %p100 = scmp.eq.s32.totalorder %s19, 1
      %p101 = por %p99, %p100
      %p102 = scmp.ne.s32.totalorder %s94, %s97
      %p103 = scmp.eq.s32.totalorder %s19, 0
      %p104 = por %p102, %p103
      %p105 = scmp.ne.s32.totalorder %s94, %s97
      %p106 = scmp.eq.s32.totalorder %s24, 1
      %p107 = por %p105, %p106
      %p108 = scmp.ne.s32.totalorder %s97, %s98
      %p109 = scmp.eq.s32.totalorder %s24, 0
      %p110 = por %p108, %p109
      %p111 = scmp.ne.s32.totalorder %s97, %s98
      %p112 = scmp.eq.s32.totalorder %s25, 1
      %p113 = por %p111, %p112
      %p115 = scmp.ne.s32.totalorder %s98, %s114
      %p116 = scmp.eq.s32.totalorder %s25, 0
      %p117 = por %p115, %p116
      %s118 = ssub.s32 %s26, %s45
      %s119 = ssub.s32 %s27, %s41
      %s120 = sor.u32 %s118, %s119
      %s121 = ssub.s32 %s28, %s37
      %s122 = sor.u32 %s120, %s121
      %p123 = scmp.eq.s32.totalorder %s122, 0
      %s125 = sadd.s32 %s124, 1
      %s126 = scalar_select %p123, %s124, %s125
      %p129 = pneg %p123
      %p130 = scmp.eq.s32.totalorder %s19, 1
      %p131 = por %p129, %p130
      %p132 = scmp.ne.s32.totalorder %s124, %s127
      %p133 = scmp.eq.s32.totalorder %s19, 0
      %p134 = por %p132, %p133
      %p135 = scmp.ne.s32.totalorder %s124, %s127
      %p136 = scmp.eq.s32.totalorder %s24, 1
      %p137 = por %p135, %p136
      %p138 = scmp.ne.s32.totalorder %s127, %s128
      %p139 = scmp.eq.s32.totalorder %s24, 0
      %p140 = por %p138, %p139
      %p141 = scmp.ne.s32.totalorder %s127, %s128
      %p142 = scmp.eq.s32.totalorder %s25, 1
      %p143 = por %p141, %p142
      %p145 = scmp.ne.s32.totalorder %s128, %s144
      %p146 = scmp.eq.s32.totalorder %s25, 0
      %p147 = por %p145, %p146
      %s148 = ssub.s32 %s26, %s45
      %s149 = ssub.s32 %s27, %s41
      %s150 = sor.u32 %s148, %s149
      %s151 = ssub.s32 %s28, %s37
      %s152 = sor.u32 %s150, %s151
      %p153 = scmp.eq.s32.totalorder %s152, 0
      %s155 = sadd.s32 %s154, 1
      %s156 = scalar_select %p153, %s154, %s155
      %p159 = pneg %p153
      %p160 = scmp.eq.s32.totalorder %s19, 1
      %p161 = por %p159, %p160
      %p162 = scmp.ne.s32.totalorder %s154, %s157
      %p163 = scmp.eq.s32.totalorder %s19, 0
      %p164 = por %p162, %p163
      %p165 = scmp.ne.s32.totalorder %s154, %s157
      %p166 = scmp.eq.s32.totalorder %s24, 1
      %p167 = por %p165, %p166
      %p168 = scmp.ne.s32.totalorder %s157, %s158
      %p169 = scmp.eq.s32.totalorder %s24, 0
      %p170 = por %p168, %p169
      %p171 = scmp.ne.s32.totalorder %s157, %s158
      %p172 = scmp.eq.s32.totalorder %s25, 1
      %p173 = por %p171, %p172
      %p175 = scmp.ne.s32.totalorder %s158, %s174
      %p176 = scmp.eq.s32.totalorder %s25, 0
      %p177 = por %p175, %p176
      %p178 = scmp.le.s32.totalorder 1, %s19
      %p179 = scmp.lt.s32.totalorder %s19, 3
      %p180 = pnand %p178, %p179
      %p181 = pneg %p180
      // Predicated region
      $region9: #{render_pipeline.1} parent=5 // pred_check
        _
      $region10: #{render_pipeline.1} parent=5 // pred_check_branch
        %183 = sbr.rel (%p180) target = $region12
      $region11: #{render_pipeline.1} parent=5 // pred_region
        %s184 = ssub.s32 %s19, 1
        // Predicated region
        $region13: #{render_pipeline.1} parent=11 // pred_check
          %p185 = pneg %p59
        $region14: #{render_pipeline.1} parent=11 // pred_check_branch
          %187 = sbr.rel (%p185) target = $region16
        $region15: #{render_pipeline.1} parent=11 // pred_region
          %s189 = ssub.s32 16, 16
          %190 = vsyncadd [#allocation4], %s189
          %s192 = sshll.u32 %s0, 4
          %s193 = int_to_ptr.vmem [resolvable:$true] %s192
          %195 = dma.vmem_to_smem %s193, 16, [#allocation2], [#allocation4]
        $region16: #{render_pipeline.1} parent=11 // pred_fallthru
          _
        // Predicated region
        $region17: #{render_pipeline.1} parent=11 // pred_check
          %p196 = pneg %p80
        $region18: #{render_pipeline.1} parent=11 // pred_check_branch
          %198 = sbr.rel (%p196) target = $region20
        $region19: #{render_pipeline.1} parent=11 // pred_region
          %s200 = ssub.s32 48, 48
          %201 = vsyncadd [#allocation6], %s200
          %s203 = sshll.u32 %s1, 4
          %s204 = int_to_ptr.vmem [resolvable:$true] %s203
          %206 = dma.vmem_to_smem %s204, 48, [#allocation5], [#allocation6]
        $region20: #{render_pipeline.1} parent=11 // pred_fallthru
          _
      $region12: #{render_pipeline.1} parent=5 // pred_fallthru
        _
      %p207 = scmp.lt.s32.totalorder %s19, 2
      // Predicated region
      $region21: #{render_pipeline.1} parent=5 // pred_check
        %p208 = pneg %p207
      $region22: #{render_pipeline.1} parent=5 // pred_check_branch
        %210 = sbr.rel (%p208) target = $region24
      $region23: #{render_pipeline.1} parent=5 // pred_region
        _
      $region24: #{render_pipeline.1} parent=5 // pred_fallthru
        _
      %p211 = scmp.le.s32.totalorder 1, %s19
      %p212 = scmp.lt.s32.totalorder %s19, 3
      %p213 = pnand %p211, %p212
      %p214 = pneg %p213
      // Predicated region
      $region25: #{render_pipeline.1} parent=5 // pred_check
        _
      $region26: #{render_pipeline.1} parent=5 // pred_check_branch
        %216 = sbr.rel (%p213) target = $region28
      $region27: #{render_pipeline.1} parent=5 // pred_region
        %s217 = ssub.s32 %s19, 1
        // Predicated region
        $region29: #{render_pipeline.1} parent=27 // pred_check
          %p218 = pneg %p59
        $region30: #{render_pipeline.1} parent=27 // pred_check_branch
          %220 = sbr.rel (%p218) target = $region32
        $region31: #{render_pipeline.1} parent=27 // pred_region
          %221 = dma.done [#allocation4], 16
        $region32: #{render_pipeline.1} parent=27 // pred_fallthru
          _
        // Predicated region
        $region33: #{render_pipeline.1} parent=27 // pred_check
          %p222 = pneg %p80
        $region34: #{render_pipeline.1} parent=27 // pred_check_branch
          %224 = sbr.rel (%p222) target = $region36
        $region35: #{render_pipeline.1} parent=27 // pred_region
          %225 = dma.done [#allocation6], 48
        $region36: #{render_pipeline.1} parent=27 // pred_fallthru
          _
        %226 = sfence
        %p227 = pneg %p59
        %p228 = pneg %p56
        %p229 = pneg %p80
        %p230 = pneg %p77
        %p231 = pneg %p110
        %p232 = pneg %p107
        %s233 = smul.u32 2, %s30
        %p234 = scmp.lt.s32.totalorder %s29, 1
        %s235 = scalar_select %p234, %s29, 1
        %p236 = scmp.lt.s32.totalorder %s233, 1
        %s237 = scalar_select %p236, %s233, 1
        %p238 = scmp.lt.s32.totalorder %s31, 0
        %s239 = scalar_select %p238, %s31, 0
        %s240 = sadd.s32 %s239, %s237
        %s241 = smul.addr %s235, 6
        %s242 = sadd.s32 %s240, %s241
        %s243 = smul.addr %s242, 8
        %s244 = scalar_lea.vmem %s2, %s243
        %p245 = pneg %p140
        %p246 = pneg %p137
        %s247 = sand.u32 %s127, 1
        %s248 = scalar_lea.sflag [#allocation3], %s247
        %s249 = sand.u32 %s127, 1
        %s250 = smul.addr %s249, 16
        %s251 = scalar_lea.vmem [#allocation7], %s250
        %p252 = pneg %p170
        %p253 = pneg %p167
        %s254 = sand.u32 %s157, 1
        %s255 = scalar_lea.sflag [#allocation9], %s254
        %s256 = sand.u32 %s157, 1
        %s257 = smul.addr %s256, 16
        %s258 = scalar_lea.vmem [#allocation8], %s257
        %s259 = smul.u32 2, %s30
        %p260 = scmp.lt.s32.totalorder %s29, 1
        %s261 = scalar_select %p260, %s29, 1
        %p262 = scmp.lt.s32.totalorder %s259, 1
        %s263 = scalar_select %p262, %s259, 1
        %p264 = scmp.lt.s32.totalorder %s31, 0
        %s265 = scalar_select %p264, %s31, 0
        %s266 = sadd.s32 %s265, %s263
        %s267 = smul.addr %s261, 6
        %s268 = sadd.s32 %s266, %s267
        %s269 = smul.addr %s268, 8
        %s270 = scalar_lea.vmem %s2, %s269
        %s271 = smul.u32 2, %s30
        %s272 = smul.u32 2, %s30
        %s273 = smul.u32 2, %s30
        %s274 = smul.u32 %s30, 16
        %s275 = smul.u32 %s31, 128
        %v276 = vlaneseq
        %v277 = vshrl.u32 %v276, 7
        %v278 = vadd.s32 %v277, 8
        %v279 = vstv %s274
        %v280 = vadd.s32 %v277, %v279
        %v281 = vadd.s32 %v278, %v279
        %v282 = vlaneseq
        %v283 = vand.u32 %v282, 127
        %v284 = vstv %s275
        %v285 = vadd.s32 %v283, %v284
        %v286 = vcvt.s32.f32 %v280
        %v287 = vcvt.s32.f32 %v281
        %v288 = vmul.f32 %v286, 2.0
        %v289 = vmul.f32 %v287, 2.0
        %v290 = vadd.f32 %v288, -15.0
        %v291 = vadd.f32 %v289, -15.0
        %v292 = vmul.f32 %v290, 0.0625
        %v293 = vmul.f32 %v291, 0.0625
        %v294 = vcvt.s32.f32 %v285
        %v295 = vmul.f32 %v294, 2.0
        %v296 = vadd.f32 %v295, -15.0
        %v297 = vmul.f32 %v296, 0.0625
        %s298 = scvt.s32.f32 %s274
        %s299 = scvt.s32.f32 %s275
        %s300 = smul.f32 %s298, 2.0
        %s301 = sadd.f32 %s300, -15.0
        %s302 = smul.f32 %s301, 0.0625
        %s303 = sadd.f32 %s298, 15.0
        %s304 = smul.f32 %s303, 2.0
        %s305 = sadd.f32 %s304, -15.0
        %s306 = smul.f32 %s305, 0.0625
        %s307 = smul.f32 %s299, 2.0
        %s308 = sadd.f32 %s307, -15.0
        %s309 = smul.f32 %s308, 0.0625
        %s310 = sadd.f32 %s299, 127.0
        %s311 = smul.f32 %s310, 2.0
        %s312 = sadd.f32 %s311, -15.0
        %s313 = smul.f32 %s312, 0.0625
        %s314 = smul.u32 %s29, 8
        loop: start=0, step=1, limit=4
        $region37: #{render_pipeline.1} parent=27 // loop_pre_header
          _
        $region38: #{render_pipeline.1} parent=27 // loop_header
          %s316 = sphi 0, %s320
          %p317 = scmp.ge.s32.totalorder %s316, 4
          %v321 = vphi 100.0, %v731
          %v322 = vphi 100.0, %v732
          %v323 = vphi 0.0, %v733
          %v324 = vphi 0.0, %v734
          %v325 = vphi 0.0, %v735
          %v326 = vphi 0.0, %v736
          %v327 = vphi 0.0, %v737
          %v328 = vphi 0.0, %v738
          %v329 = vphi 0.0, %v739
          %v330 = vphi 0.0, %v740
        $region39: #{render_pipeline.1} parent=27 // loop_header_branch
          %319 = sbr.rel (%p317) target = $region43
        $region40: #{render_pipeline.1} parent=27 // loop_body
          %s331 = smul.u32 %s316, 2
          %s332 = sadd.s32 %s314, %s331
          %s333 = smul.u32 %s332, 4
          %s334 = sld [smem:[#allocation2 + %s333]]
          %s335 = sadd.s32 %s333, 1
          %s336 = sld [smem:[#allocation2 + %s335]]
          %s337 = sadd.s32 %s333, 2
          %s338 = sld [smem:[#allocation2 + %s337]]
          %s339 = sadd.s32 %s333, 3
          %s340 = sld [smem:[#allocation2 + %s339]]
          %p341 = scmp.ge.f32.partialorder %s336, %s309
          %p342 = scmp.le.f32.partialorder %s334, %s313
          %p343 = pnand %p341, %p342
          %p344 = pneg %p343
          %p345 = scmp.ge.f32.partialorder %s340, %s302
          %p346 = pnand %p344, %p345
          %p347 = pneg %p346
          %p348 = scmp.le.f32.partialorder %s338, %s306
          %p349 = pnand %p347, %p348
          %p350 = pneg %p349
          // Predicated region
          $region44: #{render_pipeline.1} parent=40 // pred_check
            _
          $region45: #{render_pipeline.1} parent=40 // pred_check_branch
            %352 = sbr.rel (%p349) target = $region47
          $region46: #{render_pipeline.1} parent=40 // pred_region
            %s353 = smul.u32 %s332, 18
            %s354 = sld [smem:[#allocation5 + %s353]]
            %s355 = sadd.s32 %s353, 1
            %s356 = sld [smem:[#allocation5 + %s355]]
            %s357 = sadd.s32 %s353, 2
            %s358 = sld [smem:[#allocation5 + %s357]]
            %s359 = sadd.s32 %s353, 3
            %s360 = sld [smem:[#allocation5 + %s359]]
            %s361 = sadd.s32 %s353, 4
            %s362 = sld [smem:[#allocation5 + %s361]]
            %s363 = sadd.s32 %s353, 5
            %s364 = sld [smem:[#allocation5 + %s363]]
            %s365 = sadd.s32 %s353, 6
            %s366 = sld [smem:[#allocation5 + %s365]]
            %s367 = sadd.s32 %s353, 7
            %s368 = sld [smem:[#allocation5 + %s367]]
            %s369 = sadd.s32 %s353, 8
            %s370 = sld [smem:[#allocation5 + %s369]]
            %s371 = sadd.s32 %s353, 9
            %s372 = sld [smem:[#allocation5 + %s371]]
            %s373 = sadd.s32 %s353, 10
            %s374 = sld [smem:[#allocation5 + %s373]]
            %s375 = sadd.s32 %s353, 11
            %s376 = sld [smem:[#allocation5 + %s375]]
            %s377 = sadd.s32 %s353, 12
            %s378 = sld [smem:[#allocation5 + %s377]]
            %s379 = sadd.s32 %s353, 13
            %s380 = sld [smem:[#allocation5 + %s379]]
            %s381 = sadd.s32 %s353, 14
            %s382 = sld [smem:[#allocation5 + %s381]]
            %s383 = sadd.s32 %s353, 15
            %s384 = sld [smem:[#allocation5 + %s383]]
            %s385 = sadd.s32 %s353, 16
            %s386 = sld [smem:[#allocation5 + %s385]]
            %s387 = sadd.s32 %s353, 17
            %s388 = sld [smem:[#allocation5 + %s387]]
            %v389 = vstv %s354
            %v390 = vmul.f32 %v389, %v297
            %v391 = vstv %s356
            %v392 = vmul.f32 %v391, %v292
            %v393 = vmul.f32 %v391, %v293
            %v394 = vadd.f32 %v390, %v392
            %v395 = vadd.f32 %v390, %v393
            %v396 = vstv %s358
            %v397 = vadd.f32 %v394, %v396
            %v398 = vadd.f32 %v395, %v396
            %v399 = vstv %s360
            %v400 = vmul.f32 %v399, %v297
            %v401 = vstv %s362
            %v402 = vmul.f32 %v401, %v292
            %v403 = vmul.f32 %v401, %v293
            %v404 = vadd.f32 %v400, %v402
            %v405 = vadd.f32 %v400, %v403
            %v406 = vstv %s364
            %v407 = vadd.f32 %v404, %v406
            %v408 = vadd.f32 %v405, %v406
            %v409 = vsub.f32 1.0, %v397
            %v410 = vsub.f32 1.0, %v398
            %v411 = vsub.f32 %v409, %v407
            %v412 = vsub.f32 %v410, %v408
            %vm413 = vcmp.ge.f32.partialorder %v397, 0.0
            %vm414 = vcmp.ge.f32.partialorder %v398, 0.0
            %vm415 = vcmp.ge.f32.partialorder %v407, 0.0
            %vm416 = vcmp.ge.f32.partialorder %v408, 0.0
            %vm417 = vmand %vm413, %vm415
            %vm418 = vmand %vm414, %vm416
            %vm419 = vcmp.ge.f32.partialorder %v411, 0.0
            %vm420 = vcmp.ge.f32.partialorder %v412, 0.0
            %vm421 = vmand %vm417, %vm419
            %vm422 = vmand %vm418, %vm420
            %v423 = vstv %s366
            %v424 = vmul.f32 %v397, %v423
            %v425 = vmul.f32 %v398, %v423
            %v426 = vstv %s368
            %v427 = vmul.f32 %v407, %v426
            %v428 = vmul.f32 %v408, %v426
            %v429 = vstv %s370
            %v430 = vmul.f32 %v411, %v429
            %v431 = vmul.f32 %v412, %v429
            %v432 = vadd.f32 %v424, %v427
            %v433 = vadd.f32 %v425, %v428
            %v434 = vadd.f32 %v432, %v430
            %v435 = vadd.f32 %v433, %v431
            %v436 = vmax.f32 %v434, 1e-08
            %v437 = vmax.f32 %v435, 1e-08
            %v438 = vrcp.pop %v436
            %v439 = vrcp.pop %v437
            %v440 = vmul.f32 %v436, %v438
            %v441 = vmul.f32 %v437, %v439
            %v442 = vsub.f32 2.0, %v440
            %v443 = vsub.f32 2.0, %v441
            %v444 = vmul.f32 %v438, %v442
            %v445 = vmul.f32 %v439, %v443
            %vm446 = vcmp.gt.f32.partialorder %v444, 0.1
            %vm447 = vcmp.gt.f32.partialorder %v445, 0.1
            %vm448 = vmand %vm421, %vm446
            %vm449 = vmand %vm422, %vm447
            %vm450 = vcmp.lt.f32.partialorder %v444, 100.0
            %vm451 = vcmp.lt.f32.partialorder %v445, 100.0
            %vm452 = vmand %vm448, %vm450
            %vm453 = vmand %vm449, %vm451
            %vm454 = vcmp.lt.f32.partialorder %v444, %v321
            %vm455 = vcmp.lt.f32.partialorder %v445, %v322
            %vm456 = vmand %vm452, %vm454
            %vm457 = vmand %vm453, %vm455
            %v458 = vmul.f32 %v424, %v444
            %v459 = vmul.f32 %v425, %v445
            %v460 = vmul.f32 %v427, %v444
            %v461 = vmul.f32 %v428, %v445
            %v462 = vmul.f32 %v430, %v444
            %v463 = vmul.f32 %v431, %v445
            %v464 = vsel %vm456, %v444, %v321
            %v465 = vsel %vm457, %v445, %v322
            %v466 = vsel %vm456, 1.0, %v323
            %v467 = vsel %vm457, 1.0, %v324
            %v468 = vstv %s372
            %v469 = vmul.f32 %v458, %v468
            %v470 = vmul.f32 %v459, %v468
            %v471 = vstv %s378
            %v472 = vmul.f32 %v460, %v471
            %v473 = vmul.f32 %v461, %v471
            %v474 = vadd.f32 %v469, %v472
            %v475 = vadd.f32 %v470, %v473
            %v476 = vstv %s384
            %v477 = vmul.f32 %v462, %v476
            %v478 = vmul.f32 %v463, %v476
            %v479 = vadd.f32 %v474, %v477
            %v480 = vadd.f32 %v475, %v478
            %v481 = vsel %vm456, %v479, %v325
            %v482 = vsel %vm457, %v480, %v326
            %v483 = vstv %s374
            %v484 = vmul.f32 %v458, %v483
            %v485 = vmul.f32 %v459, %v483
            %v486 = vstv %s380
            %v487 = vmul.f32 %v460, %v486
            %v488 = vmul.f32 %v461, %v486
            %v489 = vadd.f32 %v484, %v487
            %v490 = vadd.f32 %v485, %v488
            %v491 = vstv %s386
            %v492 = vmul.f32 %v462, %v491
            %v493 = vmul.f32 %v463, %v491
            %v494 = vadd.f32 %v489, %v492
            %v495 = vadd.f32 %v490, %v493
            %v496 = vsel %vm456, %v494, %v327
            %v497 = vsel %vm457, %v495, %v328
            %v498 = vstv %s376
            %v499 = vmul.f32 %v458, %v498
            %v500 = vmul.f32 %v459, %v498
            %v501 = vstv %s382
            %v502 = vmul.f32 %v460, %v501
            %v503 = vmul.f32 %v461, %v501
            %v504 = vadd.f32 %v499, %v502
            %v505 = vadd.f32 %v500, %v503
            %v506 = vstv %s388
            %v507 = vmul.f32 %v462, %v506
            %v508 = vmul.f32 %v463, %v506
            %v509 = vadd.f32 %v504, %v507
            %v510 = vadd.f32 %v505, %v508
            %v511 = vsel %vm456, %v509, %v329
            %v512 = vsel %vm457, %v510, %v330
          $region47: #{render_pipeline.1} parent=40 // pred_fallthru
            %v513 = vphi 0, %v464
            %v514 = vphi 0, %v465
            %v515 = vphi 0, %v466
            %v516 = vphi 0, %v467
            %v517 = vphi 0, %v481
            %v518 = vphi 0, %v482
            %v519 = vphi 0, %v496
            %v520 = vphi 0, %v497
            %v521 = vphi 0, %v511
            %v522 = vphi 0, %v512
          // Predicated region
          $region48: #{render_pipeline.1} parent=40 // pred_check
            %p523 = pneg %p349
          $region49: #{render_pipeline.1} parent=40 // pred_check_branch
            %525 = sbr.rel (%p523) target = $region51
          $region50: #{render_pipeline.1} parent=40 // pred_region
            _
          $region51: #{render_pipeline.1} parent=40 // pred_fallthru
            %v526 = vphi %v513, %v321
            %v527 = vphi %v514, %v322
            %v528 = vphi %v515, %v323
            %v529 = vphi %v516, %v324
            %v530 = vphi %v517, %v325
            %v531 = vphi %v518, %v326
            %v532 = vphi %v519, %v327
            %v533 = vphi %v520, %v328
            %v534 = vphi %v521, %v329
            %v535 = vphi %v522, %v330
          %s536 = sadd.s32 %s331, 1
          %s537 = sadd.s32 %s314, %s536
          %s538 = smul.u32 %s537, 4
          %s539 = sld [smem:[#allocation2 + %s538]]
          %s540 = sadd.s32 %s538, 1
          %s541 = sld [smem:[#allocation2 + %s540]]
          %s542 = sadd.s32 %s538, 2
          %s543 = sld [smem:[#allocation2 + %s542]]
          %s544 = sadd.s32 %s538, 3
          %s545 = sld [smem:[#allocation2 + %s544]]
          %p546 = scmp.ge.f32.partialorder %s541, %s309
          %p547 = scmp.le.f32.partialorder %s539, %s313
          %p548 = pnand %p546, %p547
          %p549 = pneg %p548
          %p550 = scmp.ge.f32.partialorder %s545, %s302
          %p551 = pnand %p549, %p550
          %p552 = pneg %p551
          %p553 = scmp.le.f32.partialorder %s543, %s306
          %p554 = pnand %p552, %p553
          %p555 = pneg %p554
          // Predicated region
          $region52: #{render_pipeline.1} parent=40 // pred_check
            _
          $region53: #{render_pipeline.1} parent=40 // pred_check_branch
            %557 = sbr.rel (%p554) target = $region55
          $region54: #{render_pipeline.1} parent=40 // pred_region
            %s558 = smul.u32 %s537, 18
            %s559 = sld [smem:[#allocation5 + %s558]]
            %s560 = sadd.s32 %s558, 1
            %s561 = sld [smem:[#allocation5 + %s560]]
            %s562 = sadd.s32 %s558, 2
            %s563 = sld [smem:[#allocation5 + %s562]]
            %s564 = sadd.s32 %s558, 3
            %s565 = sld [smem:[#allocation5 + %s564]]
            %s566 = sadd.s32 %s558, 4
            %s567 = sld [smem:[#allocation5 + %s566]]
            %s568 = sadd.s32 %s558, 5
            %s569 = sld [smem:[#allocation5 + %s568]]
            %s570 = sadd.s32 %s558, 6
            %s571 = sld [smem:[#allocation5 + %s570]]
            %s572 = sadd.s32 %s558, 7
            %s573 = sld [smem:[#allocation5 + %s572]]
            %s574 = sadd.s32 %s558, 8
            %s575 = sld [smem:[#allocation5 + %s574]]
            %s576 = sadd.s32 %s558, 9
            %s577 = sld [smem:[#allocation5 + %s576]]
            %s578 = sadd.s32 %s558, 10
            %s579 = sld [smem:[#allocation5 + %s578]]
            %s580 = sadd.s32 %s558, 11
            %s581 = sld [smem:[#allocation5 + %s580]]
            %s582 = sadd.s32 %s558, 12
            %s583 = sld [smem:[#allocation5 + %s582]]
            %s584 = sadd.s32 %s558, 13
            %s585 = sld [smem:[#allocation5 + %s584]]
            %s586 = sadd.s32 %s558, 14
            %s587 = sld [smem:[#allocation5 + %s586]]
            %s588 = sadd.s32 %s558, 15
            %s589 = sld [smem:[#allocation5 + %s588]]
            %s590 = sadd.s32 %s558, 16
            %s591 = sld [smem:[#allocation5 + %s590]]
            %s592 = sadd.s32 %s558, 17
            %s593 = sld [smem:[#allocation5 + %s592]]
            %v594 = vstv %s559
            %v595 = vmul.f32 %v594, %v297
            %v596 = vstv %s561
            %v597 = vmul.f32 %v596, %v292
            %v598 = vmul.f32 %v596, %v293
            %v599 = vadd.f32 %v595, %v597
            %v600 = vadd.f32 %v595, %v598
            %v601 = vstv %s563
            %v602 = vadd.f32 %v599, %v601
            %v603 = vadd.f32 %v600, %v601
            %v604 = vstv %s565
            %v605 = vmul.f32 %v604, %v297
            %v606 = vstv %s567
            %v607 = vmul.f32 %v606, %v292
            %v608 = vmul.f32 %v606, %v293
            %v609 = vadd.f32 %v605, %v607
            %v610 = vadd.f32 %v605, %v608
            %v611 = vstv %s569
            %v612 = vadd.f32 %v609, %v611
            %v613 = vadd.f32 %v610, %v611
            %v614 = vsub.f32 1.0, %v602
            %v615 = vsub.f32 1.0, %v603
            %v616 = vsub.f32 %v614, %v612
            %v617 = vsub.f32 %v615, %v613
            %vm618 = vcmp.ge.f32.partialorder %v602, 0.0
            %vm619 = vcmp.ge.f32.partialorder %v603, 0.0
            %vm620 = vcmp.ge.f32.partialorder %v612, 0.0
            %vm621 = vcmp.ge.f32.partialorder %v613, 0.0
            %vm622 = vmand %vm618, %vm620
            %vm623 = vmand %vm619, %vm621
            %vm624 = vcmp.ge.f32.partialorder %v616, 0.0
            %vm625 = vcmp.ge.f32.partialorder %v617, 0.0
            %vm626 = vmand %vm622, %vm624
            %vm627 = vmand %vm623, %vm625
            %v628 = vstv %s571
            %v629 = vmul.f32 %v602, %v628
            %v630 = vmul.f32 %v603, %v628
            %v631 = vstv %s573
            %v632 = vmul.f32 %v612, %v631
            %v633 = vmul.f32 %v613, %v631
            %v634 = vstv %s575
            %v635 = vmul.f32 %v616, %v634
            %v636 = vmul.f32 %v617, %v634
            %v637 = vadd.f32 %v629, %v632
            %v638 = vadd.f32 %v630, %v633
            %v639 = vadd.f32 %v637, %v635
            %v640 = vadd.f32 %v638, %v636
            %v641 = vmax.f32 %v639, 1e-08
            %v642 = vmax.f32 %v640, 1e-08
            %v643 = vrcp.pop %v641
            %v644 = vrcp.pop %v642
            %v645 = vmul.f32 %v641, %v643
            %v646 = vmul.f32 %v642, %v644
            %v647 = vsub.f32 2.0, %v645
            %v648 = vsub.f32 2.0, %v646
            %v649 = vmul.f32 %v643, %v647
            %v650 = vmul.f32 %v644, %v648
            %vm651 = vcmp.gt.f32.partialorder %v649, 0.1
            %vm652 = vcmp.gt.f32.partialorder %v650, 0.1
            %vm653 = vmand %vm626, %vm651
            %vm654 = vmand %vm627, %vm652
            %vm655 = vcmp.lt.f32.partialorder %v649, 100.0
            %vm656 = vcmp.lt.f32.partialorder %v650, 100.0
            %vm657 = vmand %vm653, %vm655
            %vm658 = vmand %vm654, %vm656
            %vm659 = vcmp.lt.f32.partialorder %v649, %v526
            %vm660 = vcmp.lt.f32.partialorder %v650, %v527
            %vm661 = vmand %vm657, %vm659
            %vm662 = vmand %vm658, %vm660
            %v663 = vmul.f32 %v629, %v649
            %v664 = vmul.f32 %v630, %v650
            %v665 = vmul.f32 %v632, %v649
            %v666 = vmul.f32 %v633, %v650
            %v667 = vmul.f32 %v635, %v649
            %v668 = vmul.f32 %v636, %v650
            %v669 = vsel %vm661, %v649, %v526
            %v670 = vsel %vm662, %v650, %v527
            %v671 = vsel %vm661, 1.0, %v528
            %v672 = vsel %vm662, 1.0, %v529
            %v673 = vstv %s577
            %v674 = vmul.f32 %v663, %v673
            %v675 = vmul.f32 %v664, %v673
            %v676 = vstv %s583
            %v677 = vmul.f32 %v665, %v676
            %v678 = vmul.f32 %v666, %v676
            %v679 = vadd.f32 %v674, %v677
            %v680 = vadd.f32 %v675, %v678
            %v681 = vstv %s589
            %v682 = vmul.f32 %v667, %v681
            %v683 = vmul.f32 %v668, %v681
            %v684 = vadd.f32 %v679, %v682
            %v685 = vadd.f32 %v680, %v683
            %v686 = vsel %vm661, %v684, %v530
            %v687 = vsel %vm662, %v685, %v531
            %v688 = vstv %s579
            %v689 = vmul.f32 %v663, %v688
            %v690 = vmul.f32 %v664, %v688
            %v691 = vstv %s585
            %v692 = vmul.f32 %v665, %v691
            %v693 = vmul.f32 %v666, %v691
            %v694 = vadd.f32 %v689, %v692
            %v695 = vadd.f32 %v690, %v693
            %v696 = vstv %s591
            %v697 = vmul.f32 %v667, %v696
            %v698 = vmul.f32 %v668, %v696
            %v699 = vadd.f32 %v694, %v697
            %v700 = vadd.f32 %v695, %v698
            %v701 = vsel %vm661, %v699, %v532
            %v702 = vsel %vm662, %v700, %v533
            %v703 = vstv %s581
            %v704 = vmul.f32 %v663, %v703
            %v705 = vmul.f32 %v664, %v703
            %v706 = vstv %s587
            %v707 = vmul.f32 %v665, %v706
            %v708 = vmul.f32 %v666, %v706
            %v709 = vadd.f32 %v704, %v707
            %v710 = vadd.f32 %v705, %v708
            %v711 = vstv %s593
            %v712 = vmul.f32 %v667, %v711
            %v713 = vmul.f32 %v668, %v711
            %v714 = vadd.f32 %v709, %v712
            %v715 = vadd.f32 %v710, %v713
            %v716 = vsel %vm661, %v714, %v534
            %v717 = vsel %vm662, %v715, %v535
          $region55: #{render_pipeline.1} parent=40 // pred_fallthru
            %v718 = vphi 0, %v669
            %v719 = vphi 0, %v670
            %v720 = vphi 0, %v671
            %v721 = vphi 0, %v672
            %v722 = vphi 0, %v686
            %v723 = vphi 0, %v687
            %v724 = vphi 0, %v701
            %v725 = vphi 0, %v702
            %v726 = vphi 0, %v716
            %v727 = vphi 0, %v717
          // Predicated region
          $region56: #{render_pipeline.1} parent=40 // pred_check
            %p728 = pneg %p554
          $region57: #{render_pipeline.1} parent=40 // pred_check_branch
            %730 = sbr.rel (%p728) target = $region59
          $region58: #{render_pipeline.1} parent=40 // pred_region
            _
          $region59: #{render_pipeline.1} parent=40 // pred_fallthru
            %v731 = vphi %v718, %v526
            %v732 = vphi %v719, %v527
            %v733 = vphi %v720, %v528
            %v734 = vphi %v721, %v529
            %v735 = vphi %v722, %v530
            %v736 = vphi %v723, %v531
            %v737 = vphi %v724, %v532
            %v738 = vphi %v725, %v533
            %v739 = vphi %v726, %v534
            %v740 = vphi %v727, %v535
        $region41: #{render_pipeline.1} parent=27 // loop_footer
          %s320 = sadd.s32 1, %s316
        $region42: #{render_pipeline.1} parent=27 // loop_footer_branch
          %315 = sbr.rel target = $region38
        $region43: #{render_pipeline.1} parent=27 // loop_exit
          _
        %741 = vst [vmem:[%s270] sm:$0xff] %v325
        %742 = vst [vmem:[%s270 + $0x8] sm:$0xff] %v326
        %s743 = scalar_lea.vmem %s270, 16
        %744 = vst [vmem:[%s743] sm:$0xff] %v327
        %745 = vst [vmem:[%s743 + $0x8] sm:$0xff] %v328
        %s746 = scalar_lea.vmem %s270, 32
        %747 = vst [vmem:[%s746] sm:$0xff] %v329
        %748 = vst [vmem:[%s746 + $0x8] sm:$0xff] %v330
        %749 = vst [vmem:[%s251] sm:$0xff] %v323
        %750 = vst [vmem:[%s251 + $0x8] sm:$0xff] %v324
        %751 = vst [vmem:[%s258] sm:$0xff] %v321
        %752 = vst [vmem:[%s258 + $0x8] sm:$0xff] %v322
        %s753 = smul.u32 2, %s30
        %p754 = scmp.lt.s32.totalorder %s29, 1
        %s755 = scalar_select %p754, %s29, 1
        %p756 = scmp.lt.s32.totalorder %s753, 1
        %s757 = scalar_select %p756, %s753, 1
        %p758 = scmp.lt.s32.totalorder %s31, 0
        %s759 = scalar_select %p758, %s31, 0
        %s760 = sadd.s32 %s759, %s757
        %s761 = smul.addr %s755, 6
        %s762 = sadd.s32 %s760, %s761
        %s763 = smul.addr %s762, 8
        %s764 = scalar_lea.vmem %s2, %s763
        %s765 = sand.u32 %s127, 1
        %s766 = scalar_lea.sflag [#allocation3], %s765
        %s767 = sand.u32 %s127, 1
        %s768 = smul.addr %s767, 16
        %s769 = scalar_lea.vmem [#allocation7], %s768
        %s770 = sand.u32 %s157, 1
        %s771 = scalar_lea.sflag [#allocation9], %s770
        %s772 = sand.u32 %s157, 1
        %s773 = smul.addr %s772, 16
        %s774 = scalar_lea.vmem [#allocation8], %s773
        // Predicated region
        $region60: #{render_pipeline.1} parent=27 // pred_check
          %p775 = pneg %p107
        $region61: #{render_pipeline.1} parent=27 // pred_check_branch
          %777 = sbr.rel (%p775) target = $region63
        $region62: #{render_pipeline.1} parent=27 // pred_region
          %s778 = smul.u32 2, %s30
        $region63: #{render_pipeline.1} parent=27 // pred_fallthru
          _
        // Predicated region
        $region64: #{render_pipeline.1} parent=27 // pred_check
          %p779 = pneg %p137
        $region65: #{render_pipeline.1} parent=27 // pred_check_branch
          %781 = sbr.rel (%p779) target = $region67
        $region66: #{render_pipeline.1} parent=27 // pred_region
          %s782 = smul.u32 2, %s30
          %s784 = ssub.s32 256, 256
          %785 = vsyncadd %s766, %s784
          %s786 = sadd.s32 %s31, %s782
          %s787 = smul.addr %s29, 2
          %s788 = sadd.s32 %s786, %s787
          %s789 = smul.addr %s788, 128
          %s790 = scalar_lea.hbm %s3, %s789
          %s791 = sshll.u32 %s769, 4
          %s792 = int_to_ptr.vmem [resolvable:$true] %s791
          %797 = dma.vmem_to_hbm [thread:$0]  %s792, 256, %s790, %s766, 128, 128, 8
        $region67: #{render_pipeline.1} parent=27 // pred_fallthru
          _
        // Predicated region
        $region68: #{render_pipeline.1} parent=27 // pred_check
          %p798 = pneg %p167
        $region69: #{render_pipeline.1} parent=27 // pred_check_branch
          %800 = sbr.rel (%p798) target = $region71
        $region70: #{render_pipeline.1} parent=27 // pred_region
          %s801 = smul.u32 2, %s30
          %s803 = ssub.s32 256, 256
          %804 = vsyncadd %s771, %s803
          %s805 = sadd.s32 %s31, %s801
          %s806 = smul.addr %s29, 2
          %s807 = sadd.s32 %s805, %s806
          %s808 = smul.addr %s807, 128
          %s809 = scalar_lea.hbm %s4, %s808
          %s810 = sshll.u32 %s774, 4
          %s811 = int_to_ptr.vmem [resolvable:$true] %s810
          %816 = dma.vmem_to_hbm [thread:$0]  %s811, 256, %s809, %s771, 128, 128, 8
        $region71: #{render_pipeline.1} parent=27 // pred_fallthru
          _
      $region28: #{render_pipeline.1} parent=5 // pred_fallthru
        _
      %p817 = scmp.le.s32.totalorder 2, %s19
      // Predicated region
      $region72: #{render_pipeline.1} parent=5 // pred_check
        %p818 = pneg %p817
      $region73: #{render_pipeline.1} parent=5 // pred_check_branch
        %820 = sbr.rel (%p818) target = $region75
      $region74: #{render_pipeline.1} parent=5 // pred_region
        %s821 = ssub.s32 %s19, 2
        // Predicated region
        $region76: #{render_pipeline.1} parent=74 // pred_check
          %p822 = pneg %p113
        $region77: #{render_pipeline.1} parent=74 // pred_check_branch
          %824 = sbr.rel (%p822) target = $region79
        $region78: #{render_pipeline.1} parent=74 // pred_region
          %s825 = smul.u32 2, %s33
          %p826 = scmp.lt.s32.totalorder %s32, 1
          %s827 = scalar_select %p826, %s32, 1
          %p828 = scmp.lt.s32.totalorder %s825, 1
          %s829 = scalar_select %p828, %s825, 1
          %p830 = scmp.lt.s32.totalorder %s34, 0
          %s831 = scalar_select %p830, %s34, 0
          %s832 = sadd.s32 %s831, %s829
          %s833 = smul.addr %s827, 6
          %s834 = sadd.s32 %s832, %s833
          %s835 = smul.addr %s834, 8
          %s836 = scalar_lea.vmem %s2, %s835
        $region79: #{render_pipeline.1} parent=74 // pred_fallthru
          _
        // Predicated region
        $region80: #{render_pipeline.1} parent=74 // pred_check
          %p837 = pneg %p143
        $region81: #{render_pipeline.1} parent=74 // pred_check_branch
          %839 = sbr.rel (%p837) target = $region83
        $region82: #{render_pipeline.1} parent=74 // pred_region
          %s840 = sand.u32 %s128, 1
          %s841 = scalar_lea.sflag [#allocation3], %s840
          %s842 = sand.u32 %s128, 1
          %s843 = smul.addr %s842, 16
          %s844 = scalar_lea.vmem [#allocation7], %s843
          %845 = dma.done %s841, 256
        $region83: #{render_pipeline.1} parent=74 // pred_fallthru
          _
        // Predicated region
        $region84: #{render_pipeline.1} parent=74 // pred_check
          %p846 = pneg %p173
        $region85: #{render_pipeline.1} parent=74 // pred_check_branch
          %848 = sbr.rel (%p846) target = $region87
        $region86: #{render_pipeline.1} parent=74 // pred_region
          %s849 = sand.u32 %s158, 1
          %s850 = scalar_lea.sflag [#allocation9], %s849
          %s851 = sand.u32 %s158, 1
          %s852 = smul.addr %s851, 16
          %s853 = scalar_lea.vmem [#allocation8], %s852
          %854 = dma.done %s850, 256
        $region87: #{render_pipeline.1} parent=74 // pred_fallthru
          _
      $region75: #{render_pipeline.1} parent=5 // pred_fallthru
        _
    $region6: #{render_pipeline.1} parent=1 // loop_footer
      %s23 = sadd.s32 1, %s19
    $region7: #{render_pipeline.1} parent=1 // loop_footer_branch
      %18 = sbr.rel target = $region3
    $region8: #{render_pipeline.1} parent=1 // loop_exit
      _
    %855 = vsyncpa [#allocation3], 1
    %s856 = scalar_lea.sflag [#allocation3], 1
    %857 = vsyncpa %s856, 1
    %858 = vsyncpa [#allocation9], 1
    %s859 = scalar_lea.sflag [#allocation9], 1
    %860 = vsyncpa %s859, 1
    %861 = vsyncpa [#allocation4], 1
    %s862 = scalar_lea.sflag [#allocation4], 1
    %863 = vsyncpa %s862, 1
    %864 = vsyncpa [#allocation6], 1

</llo_original>
